<compile_context>
chip_gen: v7x
topology: tpu7x:2x2x1
jax: 0.10.0
libtpu: 0.0.40
codegen_flags: <defaults>
</compile_context>

<pallas_src>
import jax
import jax.numpy as jnp
from jax.experimental import pallas as pl
from jax.experimental.pallas import tpu as pltpu


# ----------------------------------------------------------------------------- kernel

def mlp17_kernel(feat_ref, v_in0_ref, v_in1_ref, v_in2_ref, v_in3_ref,
                 v_mid_ref, v_out_ref, b_ref, out_ref):
    # feat_ref  : (1, F)      dense feature row, layout [in1|out1|out2|out3|pad]
    # v_in*_ref : (K_blk, H)  pre-scaled block-entry weights (layers 0/4/8/12),
    #                         rows permuted into the prefix layout, K trimmed
    # v_mid_ref : (9, H, H)   pre-scaled middle hidden weights (1,2,5,6,9,10,13,14,15)
    # v_out_ref : (4, H, F)   column-placed block-output weights (3,7,11,16)
    # b_ref     : (17, F)     per-layer biases, lane-placed (g folded into weights)
    # out_ref   : (1, F)      lane-dense output; real result in lanes [0:out_ch]
    H = v_mid_ref.shape[1]
    F = feat_ref.shape[1]

    # Explicit precision choice: DEFAULT = one bf16 MXU pass, f32 accumulator.
    PREC = jax.lax.Precision.DEFAULT

    # One full-width load of the bias table; per-layer bias is a vreg slice.
    biases = b_ref[...]                                     # (17, F)

    def bias(li, w):
        return biases[li:li + 1, 0:w]                       # (1, w) in-register slice

    feat = feat_ref[...]                                    # (1, F)
    v_in = (v_in0_ref, v_in1_ref, v_in2_ref, v_in3_ref)

    mid_slot = 0
    for blk in range(4):
        li = 4 * blk

        # --- block-entry layer (0 / 4 / 8 / 12): contraction trimmed to the
        #     real fan-in, which is a lane-0 prefix of the dense feature row.
        w = v_in[blk][...]                                  # (K_blk, H), pre-scaled
        k = w.shape[0]
        h = jnp.dot(feat[:, :k], w,
                    preferred_element_type=jnp.float32, precision=PREC)
        h = jnp.maximum(h + bias(li, H), 0.0)

        # --- middle hidden layers (H x H), pre-scaled weights
        n_mid = 3 if blk == 3 else 2
        for m in range(n_mid):
            lm = li + 1 + m
            wv = v_mid_ref[mid_slot]                        # (H, H)
            mid_slot += 1
            h = jnp.dot(h, wv, preferred_element_type=jnp.float32, precision=PREC)
            h = jnp.maximum(h + bias(lm, H), 0.0)

        # --- block-output layer (3 / 7 / 11 weight-normed + ReLU; 16 plain Linear)
        lo = li + 1 + n_mid
        wv = v_out_ref[blk]                                 # (H, F), columns pre-placed
        y = jnp.dot(h, wv, preferred_element_type=jnp.float32, precision=PREC)
        if blk < 3:
            # y is exactly zero outside this block's reserved lanes (zero weight
            # columns, zero bias lanes, relu(0)=0), so the DenseNet concat is a
            # plain add into the dense feature row.
            feat = feat + jnp.maximum(y + bias(lo, F), 0.0)
        else:
            out_ref[...] = (y + bias(lo, F)).astype(out_ref.dtype)


# ----------------------------------------------------------------------------- wrapper

def mlp17_forward(feat0, v_in, v_mid, v_out, b_tab):
    args = (feat0, *v_in, v_mid, v_out, b_tab)
    return pl.pallas_call(
        mlp17_kernel,
        out_shape=jax.ShapeDtypeStruct((1, feat0.shape[1]), jnp.float32),
        in_specs=[pl.BlockSpec(memory_space=pltpu.MemorySpace.VMEM)
                  for _ in range(len(args))],
        out_specs=pl.BlockSpec(memory_space=pltpu.MemorySpace.VMEM),
    )(*args)


# ----------------------------------------------------------------------------- params

def layer_dims(in_ch, out_ch, hidden_ch):
    dims = [(in_ch, hidden_ch)] + [(hidden_ch, hidden_ch)] * 3
    dims += [(hidden_ch + in_ch, hidden_ch)] + [(hidden_ch, hidden_ch)] * 3
    dims += [(2 * hidden_ch + in_ch, hidden_ch)] + [(hidden_ch, hidden_ch)] * 3
    dims += [(3 * hidden_ch + in_ch, hidden_ch)] + [(hidden_ch, hidden_ch)] * 3
    dims += [(hidden_ch, out_ch)]
    return dims  # 17 layers


def make_params(key, in_ch, out_ch, hidden_ch):
    dims = layer_dims(in_ch, out_ch, hidden_ch)
    keys = jax.random.split(key, 3 * len(dims) + 1)
    latent = jax.random.uniform(keys[0], (1, in_ch), jnp.float32)  # torch.rand
    vs, gs, bs = [], [], []
    for i, (fi, fo) in enumerate(dims):
        kv, kg, kb = keys[1 + 3 * i], keys[2 + 3 * i], keys[3 + 3 * i]
        bound = 1.0 / jnp.sqrt(fi)
        vs.append(jax.random.uniform(kv, (fi, fo), jnp.float32, -bound, bound))
        bs.append(jax.random.uniform(kb, (1, fo), jnp.float32, -bound, bound))
        if i < 16:  # last Linear of net4 has no weight_norm
            gs.append(jax.random.uniform(kg, (1, fo), jnp.float32, 0.5, 1.5))
    return latent, vs, gs, bs


def dense_width(in_ch, hidden_ch):
    need = in_ch + 3 * hidden_ch
    return max(128, ((need + 127) // 128) * 128)


def fold_weight_norm(v, g):
    # Offline weight-norm fold:  w = v * (g / ||v||_col)   (exact in f32 on host).
    return v * (g / jnp.sqrt(jnp.sum(v * v, axis=0, keepdims=True)))


def pack_params(latent, vs, gs, bs, in_ch, out_ch, hidden_ch):
    """One-time host-side packing.

    Dense feature row lane layout (prefix order so each block's real fan-in is
    a contiguous lane-0 prefix):  [ in1 | out1 | out2 | out3 | pad ].
    """
    F = dense_width(in_ch, hidden_ch)
    H = hidden_ch
    off_in1 = 0
    off_o1 = in_ch
    off_o2 = in_ch + H
    off_o3 = in_ch + 2 * H
    assert off_o3 + H <= F

    feat0 = jnp.zeros((1, F), jnp.float32).at[:, off_in1:off_in1 + in_ch].set(latent)

    # Fold weight-norm (g * rsqrt(sum v^2)) into the weights for layers 0..15.
    ws = [fold_weight_norm(vs[i], gs[i]) if i < 16 else vs[16] for i in range(17)]

    def round8(n):
        return ((n + 7) // 8) * 8

    def place_rows(w, segments, k_real):
        # Permute torch's concat order into the prefix lane layout; pad fan-in
        # up to a multiple of 8 sublanes (exact: the extra rows are zero).
        out = jnp.zeros((round8(k_real), w.shape[1]), jnp.float32)
        for (src, n, dst) in segments:
            out = out.at[dst:dst + n, :].set(w[src:src + n, :])
        return out

    # torch concat orders: in2=[out1,in1], in3=[out2,out1,in1], in4=[out3,out2,out1,in1]
    v_in = (
        place_rows(ws[0], [(0, in_ch, off_in1)], in_ch),
        place_rows(ws[4], [(0, H, off_o1), (H, in_ch, off_in1)], in_ch + H),
        place_rows(ws[8], [(0, H, off_o2), (H, H, off_o1), (2 * H, in_ch, off_in1)],
                   in_ch + 2 * H),
        place_rows(ws[12], [(0, H, off_o3), (H, H, off_o2), (2 * H, H, off_o1),
                            (3 * H, in_ch, off_in1)], in_ch + 3 * H),
    )

    v_mid = jnp.stack([ws[i] for i in (1, 2, 5, 6, 9, 10, 13, 14, 15)])  # (9, H, H)

    def place_cols(w, dst):
        return jnp.zeros((w.shape[0], F), jnp.float32).at[:, dst:dst + w.shape[1]].set(w)

    v_out = jnp.stack([
        place_cols(ws[3], off_o1),
        place_cols(ws[7], off_o2),
        place_cols(ws[11], off_o3),
        place_cols(ws[16], 0),
    ])                                                                   # (4, H, F)

    # Bias-only table (g already folded into the weights).
    col_off = {3: off_o1, 7: off_o2, 11: off_o3, 16: 0}
    b_tab = jnp.zeros((17, F), jnp.float32)
    for li in range(17):
        off = col_off.get(li, 0)
        b_tab = b_tab.at[li, off:off + bs[li].shape[1]].set(bs[li][0])

    # --- host-side invariants that make "concat as add" exact in-kernel -----
    # Folded weights must be finite (no zero-norm columns hit rsqrt here).
    for w in (*v_in, v_mid, v_out, b_tab, feat0):
        assert bool(jnp.all(jnp.isfinite(w)))
    # Block-output weight columns and bias lanes outside the reserved slot are 0.
    for blk, off in enumerate((off_o1, off_o2, off_o3)):
        w = v_out[blk]
        assert bool(jnp.all(w[:, :off] == 0.0)) and bool(jnp.all(w[:, off + H:] == 0.0))
        row = b_tab[4 * blk + 3]
        assert bool(jnp.all(row[:off] == 0.0)) and bool(jnp.all(row[off + H:] == 0.0))

    return feat0, v_in, v_mid, v_out, b_tab


# ----------------------------------------------------------------------------- reference

def mlp17_reference(latent, vs, gs, bs):
    def layer(x, li, relu=True):
        v = vs[li]
        if li < 16:
            w = v * (gs[li] / jnp.linalg.norm(v, axis=0, keepdims=True))
        else:
            w = v
        y = x @ w + bs[li]
        return jnp.maximum(y, 0.0) if relu else y

    in1 = latent
    h = in1
    for li in range(0, 4):
        h = layer(h, li)
    in2 = jnp.concatenate([h, in1], axis=-1)
    h = in2
    for li in range(4, 8):
        h = layer(h, li)
    in3 = jnp.concatenate([h, in2], axis=-1)
    h = in3
    for li in range(8, 12):
        h = layer(h, li)
    in4 = jnp.concatenate([h, in3], axis=-1)
    h = in4
    for li in range(12, 16):
        h = layer(h, li)
    return layer(h, 16, relu=False)


# ----------------------------------------------------------------------------- main

if __name__ == "__main__":
    in_ch, out_ch, hidden_ch = 8, 4, 32
    key = jax.random.PRNGKey(0)
    latent, vs, gs, bs = make_params(key, in_ch, out_ch, hidden_ch)

    # One-time packing (weight-norm fold + layout plumbing done outside the kernel).
    feat0, v_in, v_mid, v_out, b_tab = pack_params(
        latent, vs, gs, bs, in_ch, out_ch, hidden_ch)

    out_full = mlp17_forward(feat0, v_in, v_mid, v_out, b_tab)
    out_full = jax.block_until_ready(out_full)
    out = out_full[:, :out_ch]

    ref = mlp17_reference(latent, vs, gs, bs)
    assert out.shape == (1, out_ch)
    assert jnp.allclose(out, ref, rtol=1e-3, atol=1e-4), (out, ref)
    print("KERNEL_OK")
</pallas_src>

<mosaic_0001>
module attributes {stable_mosaic.version = 11 : i64} {
  func.func @mlp17_kernel(%arg0: memref<1x128xf32, #tpu.memory_space<vmem>>, %arg1: memref<8x32xf32, #tpu.memory_space<vmem>>, %arg2: memref<40x32xf32, #tpu.memory_space<vmem>>, %arg3: memref<72x32xf32, #tpu.memory_space<vmem>>, %arg4: memref<104x32xf32, #tpu.memory_space<vmem>>, %arg5: memref<9x32x32xf32, #tpu.memory_space<vmem>>, %arg6: memref<4x32x128xf32, #tpu.memory_space<vmem>>, %arg7: memref<17x128xf32, #tpu.memory_space<vmem>>, %arg8: memref<1x128xf32, #tpu.memory_space<vmem>>) attributes {dimension_semantics = [], scalar_prefetch = 0 : i64, scratch_operands = 0 : i64, tpu.core_type = #tpu.core_type<tc>} {
    %c0 = arith.constant 0 : index
    %c0_0 = arith.constant 0 : index
    %0 = vector.load %arg7[%c0, %c0_0] : memref<17x128xf32, #tpu.memory_space<vmem>>, vector<17x128xf32>
    %c0_1 = arith.constant 0 : index
    %c0_2 = arith.constant 0 : index
    %1 = vector.load %arg0[%c0_1, %c0_2] : memref<1x128xf32, #tpu.memory_space<vmem>>, vector<1x128xf32>
    %c0_3 = arith.constant 0 : index
    %c0_4 = arith.constant 0 : index
    %2 = vector.load %arg1[%c0_3, %c0_4] : memref<8x32xf32, #tpu.memory_space<vmem>>, vector<8x32xf32>
    %3 = vector.extract_strided_slice %1 {offsets = [0, 0], sizes = [1, 8], strides = [1, 1]} : vector<1x128xf32> to vector<1x8xf32>
    %cst = arith.constant dense<0.000000e+00> : vector<1x32xf32>
    %4 = tpu.matmul %3, %2, %cst {dimension_numbers = #tpu.dot_dimension_numbers<[1], [0], [0], [1], [0, 0, 1, 1], [], []>} : vector<1x8xf32>, vector<8x32xf32>, vector<1x32xf32> -> vector<1x32xf32>
    %5 = vector.extract_strided_slice %0 {offsets = [0, 0], sizes = [1, 32], strides = [1, 1]} : vector<17x128xf32> to vector<1x32xf32>
    %6 = arith.addf %4, %5 : vector<1x32xf32>
    %cst_5 = arith.constant 0.000000e+00 : f32
    %7 = vector.broadcast %cst_5 : f32 to vector<1x32xf32>
    %8 = arith.maximumf %6, %7 : vector<1x32xf32>
    %c0_6 = arith.constant 0 : index
    %c0_7 = arith.constant 0 : index
    %c0_8 = arith.constant 0 : index
    %9 = vector.load %arg5[%c0_6, %c0_7, %c0_8] : memref<9x32x32xf32, #tpu.memory_space<vmem>>, vector<1x32x32xf32>
    %10 = vector.shape_cast %9 : vector<1x32x32xf32> to vector<32x32xf32>
    %cst_9 = arith.constant dense<0.000000e+00> : vector<1x32xf32>
    %11 = tpu.matmul %8, %10, %cst_9 {dimension_numbers = #tpu.dot_dimension_numbers<[1], [0], [0], [1], [0, 0, 1, 1], [], []>} : vector<1x32xf32>, vector<32x32xf32>, vector<1x32xf32> -> vector<1x32xf32>
    %12 = vector.extract_strided_slice %0 {offsets = [1, 0], sizes = [1, 32], strides = [1, 1]} : vector<17x128xf32> to vector<1x32xf32>
    %13 = arith.addf %11, %12 : vector<1x32xf32>
    %cst_10 = arith.constant 0.000000e+00 : f32
    %14 = vector.broadcast %cst_10 : f32 to vector<1x32xf32>
    %15 = arith.maximumf %13, %14 : vector<1x32xf32>
    %c1 = arith.constant 1 : index
    %c0_11 = arith.constant 0 : index
    %c0_12 = arith.constant 0 : index
    %16 = vector.load %arg5[%c1, %c0_11, %c0_12] : memref<9x32x32xf32, #tpu.memory_space<vmem>>, vector<1x32x32xf32>
    %17 = vector.shape_cast %16 : vector<1x32x32xf32> to vector<32x32xf32>
    %cst_13 = arith.constant dense<0.000000e+00> : vector<1x32xf32>
    %18 = tpu.matmul %15, %17, %cst_13 {dimension_numbers = #tpu.dot_dimension_numbers<[1], [0], [0], [1], [0, 0, 1, 1], [], []>} : vector<1x32xf32>, vector<32x32xf32>, vector<1x32xf32> -> vector<1x32xf32>
    %19 = vector.extract_strided_slice %0 {offsets = [2, 0], sizes = [1, 32], strides = [1, 1]} : vector<17x128xf32> to vector<1x32xf32>
    %20 = arith.addf %18, %19 : vector<1x32xf32>
    %cst_14 = arith.constant 0.000000e+00 : f32
    %21 = vector.broadcast %cst_14 : f32 to vector<1x32xf32>
    %22 = arith.maximumf %20, %21 : vector<1x32xf32>
    %c0_15 = arith.constant 0 : index
    %c0_16 = arith.constant 0 : index
    %c0_17 = arith.constant 0 : index
    %23 = vector.load %arg6[%c0_15, %c0_16, %c0_17] : memref<4x32x128xf32, #tpu.memory_space<vmem>>, vector<1x32x128xf32>
    %24 = vector.shape_cast %23 : vector<1x32x128xf32> to vector<32x128xf32>
    %cst_18 = arith.constant dense<0.000000e+00> : vector<1x128xf32>
    %25 = tpu.matmul %22, %24, %cst_18 {dimension_numbers = #tpu.dot_dimension_numbers<[1], [0], [0], [1], [0, 0, 1, 1], [], []>} : vector<1x32xf32>, vector<32x128xf32>, vector<1x128xf32> -> vector<1x128xf32>
    %26 = vector.extract_strided_slice %0 {offsets = [3, 0], sizes = [1, 128], strides = [1, 1]} : vector<17x128xf32> to vector<1x128xf32>
    %27 = arith.addf %25, %26 : vector<1x128xf32>
    %cst_19 = arith.constant 0.000000e+00 : f32
    %28 = vector.broadcast %cst_19 : f32 to vector<1x128xf32>
    %29 = arith.maximumf %27, %28 : vector<1x128xf32>
    %30 = arith.addf %1, %29 : vector<1x128xf32>
    %c0_20 = arith.constant 0 : index
    %c0_21 = arith.constant 0 : index
    %31 = vector.load %arg2[%c0_20, %c0_21] : memref<40x32xf32, #tpu.memory_space<vmem>>, vector<40x32xf32>
    %32 = vector.extract_strided_slice %30 {offsets = [0, 0], sizes = [1, 40], strides = [1, 1]} : vector<1x128xf32> to vector<1x40xf32>
    %cst_22 = arith.constant dense<0.000000e+00> : vector<1x32xf32>
    %33 = tpu.matmul %32, %31, %cst_22 {dimension_numbers = #tpu.dot_dimension_numbers<[1], [0], [0], [1], [0, 0, 1, 1], [], []>} : vector<1x40xf32>, vector<40x32xf32>, vector<1x32xf32> -> vector<1x32xf32>
    %34 = vector.extract_strided_slice %0 {offsets = [4, 0], sizes = [1, 32], strides = [1, 1]} : vector<17x128xf32> to vector<1x32xf32>
    %35 = arith.addf %33, %34 : vector<1x32xf32>
    %cst_23 = arith.constant 0.000000e+00 : f32
    %36 = vector.broadcast %cst_23 : f32 to vector<1x32xf32>
    %37 = arith.maximumf %35, %36 : vector<1x32xf32>
    %c2 = arith.constant 2 : index
    %c0_24 = arith.constant 0 : index
    %c0_25 = arith.constant 0 : index
    %38 = vector.load %arg5[%c2, %c0_24, %c0_25] : memref<9x32x32xf32, #tpu.memory_space<vmem>>, vector<1x32x32xf32>
    %39 = vector.shape_cast %38 : vector<1x32x32xf32> to vector<32x32xf32>
    %cst_26 = arith.constant dense<0.000000e+00> : vector<1x32xf32>
    %40 = tpu.matmul %37, %39, %cst_26 {dimension_numbers = #tpu.dot_dimension_numbers<[1], [0], [0], [1], [0, 0, 1, 1], [], []>} : vector<1x32xf32>, vector<32x32xf32>, vector<1x32xf32> -> vector<1x32xf32>
    %41 = vector.extract_strided_slice %0 {offsets = [5, 0], sizes = [1, 32], strides = [1, 1]} : vector<17x128xf32> to vector<1x32xf32>
    %42 = arith.addf %40, %41 : vector<1x32xf32>
    %cst_27 = arith.constant 0.000000e+00 : f32
    %43 = vector.broadcast %cst_27 : f32 to vector<1x32xf32>
    %44 = arith.maximumf %42, %43 : vector<1x32xf32>
    %c3 = arith.constant 3 : index
    %c0_28 = arith.constant 0 : index
    %c0_29 = arith.constant 0 : index
    %45 = vector.load %arg5[%c3, %c0_28, %c0_29] : memref<9x32x32xf32, #tpu.memory_space<vmem>>, vector<1x32x32xf32>
    %46 = vector.shape_cast %45 : vector<1x32x32xf32> to vector<32x32xf32>
    %cst_30 = arith.constant dense<0.000000e+00> : vector<1x32xf32>
    %47 = tpu.matmul %44, %46, %cst_30 {dimension_numbers = #tpu.dot_dimension_numbers<[1], [0], [0], [1], [0, 0, 1, 1], [], []>} : vector<1x32xf32>, vector<32x32xf32>, vector<1x32xf32> -> vector<1x32xf32>
    %48 = vector.extract_strided_slice %0 {offsets = [6, 0], sizes = [1, 32], strides = [1, 1]} : vector<17x128xf32> to vector<1x32xf32>
    %49 = arith.addf %47, %48 : vector<1x32xf32>
    %cst_31 = arith.constant 0.000000e+00 : f32
    %50 = vector.broadcast %cst_31 : f32 to vector<1x32xf32>
    %51 = arith.maximumf %49, %50 : vector<1x32xf32>
    %c1_32 = arith.constant 1 : index
    %c0_33 = arith.constant 0 : index
    %c0_34 = arith.constant 0 : index
    %52 = vector.load %arg6[%c1_32, %c0_33, %c0_34] : memref<4x32x128xf32, #tpu.memory_space<vmem>>, vector<1x32x128xf32>
    %53 = vector.shape_cast %52 : vector<1x32x128xf32> to vector<32x128xf32>
    %cst_35 = arith.constant dense<0.000000e+00> : vector<1x128xf32>
    %54 = tpu.matmul %51, %53, %cst_35 {dimension_numbers = #tpu.dot_dimension_numbers<[1], [0], [0], [1], [0, 0, 1, 1], [], []>} : vector<1x32xf32>, vector<32x128xf32>, vector<1x128xf32> -> vector<1x128xf32>
    %55 = vector.extract_strided_slice %0 {offsets = [7, 0], sizes = [1, 128], strides = [1, 1]} : vector<17x128xf32> to vector<1x128xf32>
    %56 = arith.addf %54, %55 : vector<1x128xf32>
    %cst_36 = arith.constant 0.000000e+00 : f32
    %57 = vector.broadcast %cst_36 : f32 to vector<1x128xf32>
    %58 = arith.maximumf %56, %57 : vector<1x128xf32>
    %59 = arith.addf %30, %58 : vector<1x128xf32>
    %c0_37 = arith.constant 0 : index
    %c0_38 = arith.constant 0 : index
    %60 = vector.load %arg3[%c0_37, %c0_38] : memref<72x32xf32, #tpu.memory_space<vmem>>, vector<72x32xf32>
    %61 = vector.extract_strided_slice %59 {offsets = [0, 0], sizes = [1, 72], strides = [1, 1]} : vector<1x128xf32> to vector<1x72xf32>
    %cst_39 = arith.constant dense<0.000000e+00> : vector<1x32xf32>
    %62 = tpu.matmul %61, %60, %cst_39 {dimension_numbers = #tpu.dot_dimension_numbers<[1], [0], [0], [1], [0, 0, 1, 1], [], []>} : vector<1x72xf32>, vector<72x32xf32>, vector<1x32xf32> -> vector<1x32xf32>
    %63 = vector.extract_strided_slice %0 {offsets = [8, 0], sizes = [1, 32], strides = [1, 1]} : vector<17x128xf32> to vector<1x32xf32>
    %64 = arith.addf %62, %63 : vector<1x32xf32>
    %cst_40 = arith.constant 0.000000e+00 : f32
    %65 = vector.broadcast %cst_40 : f32 to vector<1x32xf32>
    %66 = arith.maximumf %64, %65 : vector<1x32xf32>
    %c4 = arith.constant 4 : index
    %c0_41 = arith.constant 0 : index
    %c0_42 = arith.constant 0 : index
    %67 = vector.load %arg5[%c4, %c0_41, %c0_42] : memref<9x32x32xf32, #tpu.memory_space<vmem>>, vector<1x32x32xf32>
    %68 = vector.shape_cast %67 : vector<1x32x32xf32> to vector<32x32xf32>
    %cst_43 = arith.constant dense<0.000000e+00> : vector<1x32xf32>
    %69 = tpu.matmul %66, %68, %cst_43 {dimension_numbers = #tpu.dot_dimension_numbers<[1], [0], [0], [1], [0, 0, 1, 1], [], []>} : vector<1x32xf32>, vector<32x32xf32>, vector<1x32xf32> -> vector<1x32xf32>
    %70 = vector.extract_strided_slice %0 {offsets = [9, 0], sizes = [1, 32], strides = [1, 1]} : vector<17x128xf32> to vector<1x32xf32>
    %71 = arith.addf %69, %70 : vector<1x32xf32>
    %cst_44 = arith.constant 0.000000e+00 : f32
    %72 = vector.broadcast %cst_44 : f32 to vector<1x32xf32>
    %73 = arith.maximumf %71, %72 : vector<1x32xf32>
    %c5 = arith.constant 5 : index
    %c0_45 = arith.constant 0 : index
    %c0_46 = arith.constant 0 : index
    %74 = vector.load %arg5[%c5, %c0_45, %c0_46] : memref<9x32x32xf32, #tpu.memory_space<vmem>>, vector<1x32x32xf32>
    %75 = vector.shape_cast %74 : vector<1x32x32xf32> to vector<32x32xf32>
    %cst_47 = arith.constant dense<0.000000e+00> : vector<1x32xf32>
    %76 = tpu.matmul %73, %75, %cst_47 {dimension_numbers = #tpu.dot_dimension_numbers<[1], [0], [0], [1], [0, 0, 1, 1], [], []>} : vector<1x32xf32>, vector<32x32xf32>, vector<1x32xf32> -> vector<1x32xf32>
    %77 = vector.extract_strided_slice %0 {offsets = [10, 0], sizes = [1, 32], strides = [1, 1]} : vector<17x128xf32> to vector<1x32xf32>
    %78 = arith.addf %76, %77 : vector<1x32xf32>
    %cst_48 = arith.constant 0.000000e+00 : f32
    %79 = vector.broadcast %cst_48 : f32 to vector<1x32xf32>
    %80 = arith.maximumf %78, %79 : vector<1x32xf32>
    %c2_49 = arith.constant 2 : index
    %c0_50 = arith.constant 0 : index
    %c0_51 = arith.constant 0 : index
    %81 = vector.load %arg6[%c2_49, %c0_50, %c0_51] : memref<4x32x128xf32, #tpu.memory_space<vmem>>, vector<1x32x128xf32>
    %82 = vector.shape_cast %81 : vector<1x32x128xf32> to vector<32x128xf32>
    %cst_52 = arith.constant dense<0.000000e+00> : vector<1x128xf32>
    %83 = tpu.matmul %80, %82, %cst_52 {dimension_numbers = #tpu.dot_dimension_numbers<[1], [0], [0], [1], [0, 0, 1, 1], [], []>} : vector<1x32xf32>, vector<32x128xf32>, vector<1x128xf32> -> vector<1x128xf32>
    %84 = vector.extract_strided_slice %0 {offsets = [11, 0], sizes = [1, 128], strides = [1, 1]} : vector<17x128xf32> to vector<1x128xf32>
    %85 = arith.addf %83, %84 : vector<1x128xf32>
    %cst_53 = arith.constant 0.000000e+00 : f32
    %86 = vector.broadcast %cst_53 : f32 to vector<1x128xf32>
    %87 = arith.maximumf %85, %86 : vector<1x128xf32>
    %88 = arith.addf %59, %87 : vector<1x128xf32>
    %c0_54 = arith.constant 0 : index
    %c0_55 = arith.constant 0 : index
    %89 = vector.load %arg4[%c0_54, %c0_55] : memref<104x32xf32, #tpu.memory_space<vmem>>, vector<104x32xf32>
    %90 = vector.extract_strided_slice %88 {offsets = [0, 0], sizes = [1, 104], strides = [1, 1]} : vector<1x128xf32> to vector<1x104xf32>
    %cst_56 = arith.constant dense<0.000000e+00> : vector<1x32xf32>
    %91 = tpu.matmul %90, %89, %cst_56 {dimension_numbers = #tpu.dot_dimension_numbers<[1], [0], [0], [1], [0, 0, 1, 1], [], []>} : vector<1x104xf32>, vector<104x32xf32>, vector<1x32xf32> -> vector<1x32xf32>
    %92 = vector.extract_strided_slice %0 {offsets = [12, 0], sizes = [1, 32], strides = [1, 1]} : vector<17x128xf32> to vector<1x32xf32>
    %93 = arith.addf %91, %92 : vector<1x32xf32>
    %cst_57 = arith.constant 0.000000e+00 : f32
    %94 = vector.broadcast %cst_57 : f32 to vector<1x32xf32>
    %95 = arith.maximumf %93, %94 : vector<1x32xf32>
    %c6 = arith.constant 6 : index
    %c0_58 = arith.constant 0 : index
    %c0_59 = arith.constant 0 : index
    %96 = vector.load %arg5[%c6, %c0_58, %c0_59] : memref<9x32x32xf32, #tpu.memory_space<vmem>>, vector<1x32x32xf32>
    %97 = vector.shape_cast %96 : vector<1x32x32xf32> to vector<32x32xf32>
    %cst_60 = arith.constant dense<0.000000e+00> : vector<1x32xf32>
    %98 = tpu.matmul %95, %97, %cst_60 {dimension_numbers = #tpu.dot_dimension_numbers<[1], [0], [0], [1], [0, 0, 1, 1], [], []>} : vector<1x32xf32>, vector<32x32xf32>, vector<1x32xf32> -> vector<1x32xf32>
    %99 = vector.extract_strided_slice %0 {offsets = [13, 0], sizes = [1, 32], strides = [1, 1]} : vector<17x128xf32> to vector<1x32xf32>
    %100 = arith.addf %98, %99 : vector<1x32xf32>
    %cst_61 = arith.constant 0.000000e+00 : f32
    %101 = vector.broadcast %cst_61 : f32 to vector<1x32xf32>
    %102 = arith.maximumf %100, %101 : vector<1x32xf32>
    %c7 = arith.constant 7 : index
    %c0_62 = arith.constant 0 : index
    %c0_63 = arith.constant 0 : index
    %103 = vector.load %arg5[%c7, %c0_62, %c0_63] : memref<9x32x32xf32, #tpu.memory_space<vmem>>, vector<1x32x32xf32>
    %104 = vector.shape_cast %103 : vector<1x32x32xf32> to vector<32x32xf32>
    %cst_64 = arith.constant dense<0.000000e+00> : vector<1x32xf32>
    %105 = tpu.matmul %102, %104, %cst_64 {dimension_numbers = #tpu.dot_dimension_numbers<[1], [0], [0], [1], [0, 0, 1, 1], [], []>} : vector<1x32xf32>, vector<32x32xf32>, vector<1x32xf32> -> vector<1x32xf32>
    %106 = vector.extract_strided_slice %0 {offsets = [14, 0], sizes = [1, 32], strides = [1, 1]} : vector<17x128xf32> to vector<1x32xf32>
    %107 = arith.addf %105, %106 : vector<1x32xf32>
    %cst_65 = arith.constant 0.000000e+00 : f32
    %108 = vector.broadcast %cst_65 : f32 to vector<1x32xf32>
    %109 = arith.maximumf %107, %108 : vector<1x32xf32>
    %c8 = arith.constant 8 : index
    %c0_66 = arith.constant 0 : index
    %c0_67 = arith.constant 0 : index
    %110 = vector.load %arg5[%c8, %c0_66, %c0_67] : memref<9x32x32xf32, #tpu.memory_space<vmem>>, vector<1x32x32xf32>
    %111 = vector.shape_cast %110 : vector<1x32x32xf32> to vector<32x32xf32>
    %cst_68 = arith.constant dense<0.000000e+00> : vector<1x32xf32>
    %112 = tpu.matmul %109, %111, %cst_68 {dimension_numbers = #tpu.dot_dimension_numbers<[1], [0], [0], [1], [0, 0, 1, 1], [], []>} : vector<1x32xf32>, vector<32x32xf32>, vector<1x32xf32> -> vector<1x32xf32>
    %113 = vector.extract_strided_slice %0 {offsets = [15, 0], sizes = [1, 32], strides = [1, 1]} : vector<17x128xf32> to vector<1x32xf32>
    %114 = arith.addf %112, %113 : vector<1x32xf32>
    %cst_69 = arith.constant 0.000000e+00 : f32
    %115 = vector.broadcast %cst_69 : f32 to vector<1x32xf32>
    %116 = arith.maximumf %114, %115 : vector<1x32xf32>
    %c3_70 = arith.constant 3 : index
    %c0_71 = arith.constant 0 : index
    %c0_72 = arith.constant 0 : index
    %117 = vector.load %arg6[%c3_70, %c0_71, %c0_72] : memref<4x32x128xf32, #tpu.memory_space<vmem>>, vector<1x32x128xf32>
    %118 = vector.shape_cast %117 : vector<1x32x128xf32> to vector<32x128xf32>
    %cst_73 = arith.constant dense<0.000000e+00> : vector<1x128xf32>
    %119 = tpu.matmul %116, %118, %cst_73 {dimension_numbers = #tpu.dot_dimension_numbers<[1], [0], [0], [1], [0, 0, 1, 1], [], []>} : vector<1x32xf32>, vector<32x128xf32>, vector<1x128xf32> -> vector<1x128xf32>
    %120 = vector.extract_strided_slice %0 {offsets = [16, 0], sizes = [1, 128], strides = [1, 1]} : vector<17x128xf32> to vector<1x128xf32>
    %121 = arith.addf %119, %120 : vector<1x128xf32>
    %c0_74 = arith.constant 0 : index
    %c0_75 = arith.constant 0 : index
    %122 = vector.load %arg8[%c0_74, %c0_75] : memref<1x128xf32, #tpu.memory_space<vmem>>, vector<1x128xf32>
    tpu.vector_store %arg8[%c0_74, %c0_75], %121 {strides = array<i32>} : memref<1x128xf32, #tpu.memory_space<vmem>>, vector<1x128xf32>,
    return
  }
}

</mosaic_0001>

<llo_original>
// kernel: tpu_custom_call.1
$region0: #{tpu_custom_call.1}
  #allocation0 [shape = 'u32[]', space=smem, size = 0x4, offset = 0x4, fixed_abs, tag = 'smem constant byte address 0x4 - core index']
  #allocation1 [shape = 'u32[144,128]{1,0:T(1,128)}', space=vmem, size = 0x12000, scoped, tag = 'internal scratch']
  %s0 = inlined_call_operand.vmem [shape: f32[1,128], index: 0, kind: input, shape index: {}]
  %s1 = inlined_call_operand.vmem [shape: f32[8,32], index: 1, kind: input, shape index: {}]
  %s2 = inlined_call_operand.vmem [shape: f32[40,32], index: 2, kind: input, shape index: {}]
  %s3 = inlined_call_operand.vmem [shape: f32[72,32], index: 3, kind: input, shape index: {}]
  %s4 = inlined_call_operand.vmem [shape: f32[104,32], index: 4, kind: input, shape index: {}]
  %s5 = inlined_call_operand.vmem [shape: f32[9,32,32], index: 5, kind: input, shape index: {}]
  %s6 = inlined_call_operand.hbm [shape: f32[4,32,128], index: 6, kind: input, shape index: {}]
  %s7 = inlined_call_operand.vmem [shape: f32[17,128], index: 7, kind: input, shape index: {}]
  %s8 = inlined_call_operand.hbm [shape: f32[1,128], index: 8, kind: output, shape index: {}]
  %s9 = sld [smem:[#allocation0]]
  $region46: #{tpu_custom_call.1} parent=0
    _
  %s11 = ssub.s32 1, %s9
  %s12 = scalar_select 0, %s11, %s9
  $region1: #{tpu_custom_call.1} parent=0
    #allocation2 [shape = 'u8[65536]{0}', space=vmem, size = 0x10000, scoped, tag = 'input window, operand 6, single buffered']
    #allocation3 [shape = 's32[1]{0}', space=sflag, size = 0x4, scoped, tag = 'scoped memory for tpu_custom_call.1']
    #allocation4 [shape = 's32[1]{0}', space=sflag, size = 0x4, scoped, tag = 'scoped memory for tpu_custom_call.1']
    #allocation5 [shape = 'u8[512]{0}', space=vmem, size = 0x400, scoped, tag = 'output window, operand 0, single buffered']
    %13 = vsyncpa [#allocation3], 0
    %14 = vsyncpa [#allocation4], 0
    // Predicated region
    $region2: #{tpu_custom_call.1} parent=1 // pred_check
      _
    $region3: #{tpu_custom_call.1} parent=1 // pred_check_branch
      %16 = sbr.rel (0) target = $region5
    $region4: #{tpu_custom_call.1} parent=1 // pred_region
      _
    $region5: #{tpu_custom_call.1} parent=1 // pred_fallthru
      _
    // Predicated region
    $region6: #{tpu_custom_call.1} parent=1 // pred_check
      _
    $region7: #{tpu_custom_call.1} parent=1 // pred_check_branch
      %18 = sbr.rel (0) target = $region9
    $region8: #{tpu_custom_call.1} parent=1 // pred_region
      _
    $region9: #{tpu_custom_call.1} parent=1 // pred_fallthru
      _
    // Predicated region
    $region10: #{tpu_custom_call.1} parent=1 // pred_check
      _
    $region11: #{tpu_custom_call.1} parent=1 // pred_check_branch
      %20 = sbr.rel (0) target = $region13
    $region12: #{tpu_custom_call.1} parent=1 // pred_region
      _
    $region13: #{tpu_custom_call.1} parent=1 // pred_fallthru
      _
    // Predicated region
    $region14: #{tpu_custom_call.1} parent=1 // pred_check
      _
    $region15: #{tpu_custom_call.1} parent=1 // pred_check_branch
      %22 = sbr.rel (0) target = $region17
    $region16: #{tpu_custom_call.1} parent=1 // pred_region
      _
    $region17: #{tpu_custom_call.1} parent=1 // pred_fallthru
      _
    // Predicated region
    $region18: #{tpu_custom_call.1} parent=1 // pred_check
      _
    $region19: #{tpu_custom_call.1} parent=1 // pred_check_branch
      %24 = sbr.rel (0) target = $region21
    $region20: #{tpu_custom_call.1} parent=1 // pred_region
      _
    $region21: #{tpu_custom_call.1} parent=1 // pred_fallthru
      _
    // Predicated region
    $region22: #{tpu_custom_call.1} parent=1 // pred_check
      _
    $region23: #{tpu_custom_call.1} parent=1 // pred_check_branch
      %26 = sbr.rel (0) target = $region25
    $region24: #{tpu_custom_call.1} parent=1 // pred_region
      _
    $region25: #{tpu_custom_call.1} parent=1 // pred_fallthru
      _
    // Predicated region
    $region26: #{tpu_custom_call.1} parent=1 // pred_check
      _
    $region27: #{tpu_custom_call.1} parent=1 // pred_check_branch
      %28 = sbr.rel (0) target = $region29
    $region28: #{tpu_custom_call.1} parent=1 // pred_region
      %s30 = ssub.s32 2048, 2048
      %31 = vsyncadd [#allocation3], %s30
      %s32 = sshll.u32 [#allocation2], 4
      %s33 = int_to_ptr.vmem [resolvable:$true] %s32
      %38 = dma.hbm_to_vmem [thread:$0]  %s6, 2048, %s33, [#allocation3], 128, 128, 8
    $region29: #{tpu_custom_call.1} parent=1 // pred_fallthru
      _
    // Predicated region
    $region30: #{tpu_custom_call.1} parent=1 // pred_check
      _
    $region31: #{tpu_custom_call.1} parent=1 // pred_check_branch
      %40 = sbr.rel (0) target = $region33
    $region32: #{tpu_custom_call.1} parent=1 // pred_region
      _
    $region33: #{tpu_custom_call.1} parent=1 // pred_fallthru
      _
    // Predicated region
    $region34: #{tpu_custom_call.1} parent=1 // pred_check
      _
    $region35: #{tpu_custom_call.1} parent=1 // pred_check_branch
      %42 = sbr.rel (0) target = $region37
    $region36: #{tpu_custom_call.1} parent=1 // pred_region
      %43 = dma.done [#allocation3], 2048
    $region37: #{tpu_custom_call.1} parent=1 // pred_fallthru
      _
    %v44 = vld [vmem:[%s7] sm:$0xff]
    %v45 = vld [vmem:[%s7 + $0x8] sm:$0xff]
    %v46 = vld [vmem:[%s7 + $0x10] sm:$0x1]
    %v47 = vld [vmem:[%s0] sm:$0x1]
    %v48 = vld [vmem:[%s1] sm:$0xff]
    %vm49 = vcmask 64512
    %v51 = vsel %vm49, %v47, 0
    %53 = vmatprep.subr.mxu0 0.0
    %54 = vmatpush1.msra.mxu0 %v48
    %55 = vmatprep.subr.mxu0 0.0
    %56 = vmatpush1.msra.mxu0 0.0
    %57 = vmatprep.subr.mxu0 0.0
    %58 = vmatpush1.msra.mxu0 0.0
    %59 = vmatprep.subr.mxu0 0.0
    %60 = vmatpush1.msra.mxu0 0.0
    %61 = vmatprep.subr.mxu0 0.0
    %62 = vmatpush1.msra.mxu0 0.0
    %63 = vmatprep.subr.mxu0 0.0
    %64 = vmatpush1.msra.mxu0 0.0
    %65 = vmatprep.subr.mxu0 0.0
    %66 = vmatpush1.msra.mxu0 0.0
    %67 = vmatprep.subr.mxu0 0.0
    %68 = vmatpush1.msra.mxu0 0.0
    %69 = vmatprep.subr.mxu0 0.0
    %70 = vmatpush1.msra.mxu0 0.0
    %71 = vmatprep.subr.mxu0 0.0
    %72 = vmatpush1.msra.mxu0 0.0
    %73 = vmatprep.subr.mxu0 0.0
    %74 = vmatpush1.msra.mxu0 0.0
    %75 = vmatprep.subr.mxu0 0.0
    %76 = vmatpush1.msra.mxu0 0.0
    %77 = vmatprep.subr.mxu0 0.0
    %78 = vmatpush1.msra.mxu0 0.0
    %79 = vmatprep.subr.mxu0 0.0
    %80 = vmatpush1.msra.mxu0 0.0
    %81 = vmatprep.subr.mxu0 0.0
    %82 = vmatpush1.msra.mxu0 0.0
    %83 = vmatprep.subr.mxu0 0.0
    %84 = vmatpush1.msra.mxu0 0.0
    %85 = vmatprep.subr.mxu0 0.0
    %86 = vmatpush1.msra.mxu0 0.0
    %87 = vmatprep.subr.mxu0 0.0
    %88 = vmatpush1.msra.mxu0 0.0
    %89 = vmatprep.subr.mxu0 0.0
    %90 = vmatpush1.msra.mxu0 0.0
    %91 = vmatprep.subr.mxu0 0.0
    %92 = vmatpush1.msra.mxu0 0.0
    %93 = vmatprep.subr.mxu0 0.0
    %94 = vmatpush1.msra.mxu0 0.0
    %95 = vmatprep.subr.mxu0 0.0
    %96 = vmatpush1.msra.mxu0 0.0
    %97 = vmatprep.subr.mxu0 0.0
    %98 = vmatpush1.msra.mxu0 0.0
    %99 = vmatprep.subr.mxu0 0.0
    %100 = vmatpush1.msra.mxu0 0.0
    %101 = vmatprep.subr.mxu0 0.0
    %102 = vmatpush1.msra.mxu0 0.0
    %103 = vmatprep.subr.mxu0 0.0
    %104 = vmatpush1.msra.mxu0 0.0
    %105 = vmatprep.subr.mxu0 0.0
    %106 = vmatpush1.msra.mxu0 0.0
    %107 = vmatprep.subr.mxu0 0.0
    %108 = vmatpush1.msra.mxu0 0.0
    %109 = vmatprep.subr.mxu0 0.0
    %110 = vmatpush1.msra.mxu0 0.0
    %111 = vmatprep.subr.mxu0 0.0
    %112 = vmatpush1.msra.mxu0 0.0
    %113 = vmatprep.subr.mxu0 0.0
    %114 = vmatpush1.msra.mxu0 0.0
    %115 = vmatprep.subr.mxu0 0.0
    %116 = vmatpush1.msra.mxu0 0.0
    %117 = vmatprep.mubr.f32.mxu0 0.0
    %118 = vmatmul.mubr.f32.gmra.mrb[0].mxu0 %v51
    %v119 = vpop.f32.mrb[0].mxu0
    %v120 = vadd.f32 %v44, %v119
    %v121 = vpop.f32.mrb[0].mxu0
    %122 = vdwg.mxu0
    %v123 = vmax.f32 %v120, 0.0
    %v124 = vld [vmem:[%s5] sm:$0xff]
    %v125 = vld [vmem:[%s5 + $0x8] sm:$0xff]
    %v126 = vld [vmem:[%s5 + $0x10] sm:$0xff]
    %v127 = vld [vmem:[%s5 + $0x18] sm:$0xff]
    %v129 = vrot.slane %v44, 1
    %vm131 = vcmask 261120
    %v133 = vsel %vm131, %v123, 0
    %135 = vmatprep.subr.mxu0 0.0
    %136 = vmatpush1.msra.mxu0 %v124
    %137 = vmatprep.subr.mxu0 0.0
    %138 = vmatpush1.msra.mxu0 %v125
    %139 = vmatprep.subr.mxu0 0.0
    %140 = vmatpush1.msra.mxu0 %v126
    %141 = vmatprep.subr.mxu0 0.0
    %142 = vmatpush1.msra.mxu0 %v127
    %143 = vmatprep.subr.mxu0 0.0
    %144 = vmatpush1.msra.mxu0 0.0
    %145 = vmatprep.subr.mxu0 0.0
    %146 = vmatpush1.msra.mxu0 0.0
    %147 = vmatprep.subr.mxu0 0.0
    %148 = vmatpush1.msra.mxu0 0.0
    %149 = vmatprep.subr.mxu0 0.0
    %150 = vmatpush1.msra.mxu0 0.0
    %151 = vmatprep.subr.mxu0 0.0
    %152 = vmatpush1.msra.mxu0 0.0
    %153 = vmatprep.subr.mxu0 0.0
    %154 = vmatpush1.msra.mxu0 0.0
    %155 = vmatprep.subr.mxu0 0.0
    %156 = vmatpush1.msra.mxu0 0.0
    %157 = vmatprep.subr.mxu0 0.0
    %158 = vmatpush1.msra.mxu0 0.0
    %159 = vmatprep.subr.mxu0 0.0
    %160 = vmatpush1.msra.mxu0 0.0
    %161 = vmatprep.subr.mxu0 0.0
    %162 = vmatpush1.msra.mxu0 0.0
    %163 = vmatprep.subr.mxu0 0.0
    %164 = vmatpush1.msra.mxu0 0.0
    %165 = vmatprep.subr.mxu0 0.0
    %166 = vmatpush1.msra.mxu0 0.0
    %167 = vmatprep.subr.mxu0 0.0
    %168 = vmatpush1.msra.mxu0 0.0
    %169 = vmatprep.subr.mxu0 0.0
    %170 = vmatpush1.msra.mxu0 0.0
    %171 = vmatprep.subr.mxu0 0.0
    %172 = vmatpush1.msra.mxu0 0.0
    %173 = vmatprep.subr.mxu0 0.0
    %174 = vmatpush1.msra.mxu0 0.0
    %175 = vmatprep.subr.mxu0 0.0
    %176 = vmatpush1.msra.mxu0 0.0
    %177 = vmatprep.subr.mxu0 0.0
    %178 = vmatpush1.msra.mxu0 0.0
    %179 = vmatprep.subr.mxu0 0.0
    %180 = vmatpush1.msra.mxu0 0.0
    %181 = vmatprep.subr.mxu0 0.0
    %182 = vmatpush1.msra.mxu0 0.0
    %183 = vmatprep.subr.mxu0 0.0
    %184 = vmatpush1.msra.mxu0 0.0
    %185 = vmatprep.subr.mxu0 0.0
    %186 = vmatpush1.msra.mxu0 0.0
    %187 = vmatprep.subr.mxu0 0.0
    %188 = vmatpush1.msra.mxu0 0.0
    %189 = vmatprep.subr.mxu0 0.0
    %190 = vmatpush1.msra.mxu0 0.0
    %191 = vmatprep.subr.mxu0 0.0
    %192 = vmatpush1.msra.mxu0 0.0
    %193 = vmatprep.subr.mxu0 0.0
    %194 = vmatpush1.msra.mxu0 0.0
    %195 = vmatprep.subr.mxu0 0.0
    %196 = vmatpush1.msra.mxu0 0.0
    %197 = vmatprep.subr.mxu0 0.0
    %198 = vmatpush1.msra.mxu0 0.0
    %199 = vmatprep.mubr.f32.mxu0 0.0
    %200 = vmatmul.mubr.f32.gmra.mrb[0].mxu0 %v133
    %v201 = vpop.f32.mrb[0].mxu0
    %v202 = vadd.f32 %v129, %v201
    %v203 = vpop.f32.mrb[0].mxu0
    %204 = vdwg.mxu0
    %v205 = vmax.f32 %v202, 0.0
    %s206 = scalar_lea.vmem %s5, 32
    %v207 = vld [vmem:[%s206] sm:$0xff]
    %v208 = vld [vmem:[%s206 + $0x8] sm:$0xff]
    %v209 = vld [vmem:[%s206 + $0x10] sm:$0xff]
    %v210 = vld [vmem:[%s206 + $0x18] sm:$0xff]
    %v211 = vrot.slane %v44, 2
    %v214 = vsel %vm131, %v205, 0
    %216 = vmatprep.subr.mxu0 0.0
    %217 = vmatpush1.msra.mxu0 %v207
    %218 = vmatprep.subr.mxu0 0.0
    %219 = vmatpush1.msra.mxu0 %v208
    %220 = vmatprep.subr.mxu0 0.0
    %221 = vmatpush1.msra.mxu0 %v209
    %222 = vmatprep.subr.mxu0 0.0
    %223 = vmatpush1.msra.mxu0 %v210
    %224 = vmatprep.subr.mxu0 0.0
    %225 = vmatpush1.msra.mxu0 0.0
    %226 = vmatprep.subr.mxu0 0.0
    %227 = vmatpush1.msra.mxu0 0.0
    %228 = vmatprep.subr.mxu0 0.0
    %229 = vmatpush1.msra.mxu0 0.0
    %230 = vmatprep.subr.mxu0 0.0
    %231 = vmatpush1.msra.mxu0 0.0
    %232 = vmatprep.subr.mxu0 0.0
    %233 = vmatpush1.msra.mxu0 0.0
    %234 = vmatprep.subr.mxu0 0.0
    %235 = vmatpush1.msra.mxu0 0.0
    %236 = vmatprep.subr.mxu0 0.0
    %237 = vmatpush1.msra.mxu0 0.0
    %238 = vmatprep.subr.mxu0 0.0
    %239 = vmatpush1.msra.mxu0 0.0
    %240 = vmatprep.subr.mxu0 0.0
    %241 = vmatpush1.msra.mxu0 0.0
    %242 = vmatprep.subr.mxu0 0.0
    %243 = vmatpush1.msra.mxu0 0.0
    %244 = vmatprep.subr.mxu0 0.0
    %245 = vmatpush1.msra.mxu0 0.0
    %246 = vmatprep.subr.mxu0 0.0
    %247 = vmatpush1.msra.mxu0 0.0
    %248 = vmatprep.subr.mxu0 0.0
    %249 = vmatpush1.msra.mxu0 0.0
    %250 = vmatprep.subr.mxu0 0.0
    %251 = vmatpush1.msra.mxu0 0.0
    %252 = vmatprep.subr.mxu0 0.0
    %253 = vmatpush1.msra.mxu0 0.0
    %254 = vmatprep.subr.mxu0 0.0
    %255 = vmatpush1.msra.mxu0 0.0
    %256 = vmatprep.subr.mxu0 0.0
    %257 = vmatpush1.msra.mxu0 0.0
    %258 = vmatprep.subr.mxu0 0.0
    %259 = vmatpush1.msra.mxu0 0.0
    %260 = vmatprep.subr.mxu0 0.0
    %261 = vmatpush1.msra.mxu0 0.0
    %262 = vmatprep.subr.mxu0 0.0
    %263 = vmatpush1.msra.mxu0 0.0
    %264 = vmatprep.subr.mxu0 0.0
    %265 = vmatpush1.msra.mxu0 0.0
    %266 = vmatprep.subr.mxu0 0.0
    %267 = vmatpush1.msra.mxu0 0.0
    %268 = vmatprep.subr.mxu0 0.0
    %269 = vmatpush1.msra.mxu0 0.0
    %270 = vmatprep.subr.mxu0 0.0
    %271 = vmatpush1.msra.mxu0 0.0
    %272 = vmatprep.subr.mxu0 0.0
    %273 = vmatpush1.msra.mxu0 0.0
    %274 = vmatprep.subr.mxu0 0.0
    %275 = vmatpush1.msra.mxu0 0.0
    %276 = vmatprep.subr.mxu0 0.0
    %277 = vmatpush1.msra.mxu0 0.0
    %278 = vmatprep.subr.mxu0 0.0
    %279 = vmatpush1.msra.mxu0 0.0
    %280 = vmatprep.mubr.f32.mxu0 0.0
    %281 = vmatmul.mubr.f32.gmra.mrb[0].mxu0 %v214
    %v282 = vpop.f32.mrb[0].mxu0
    %v283 = vadd.f32 %v211, %v282
    %v284 = vpop.f32.mrb[0].mxu0
    %285 = vdwg.mxu0
    %v286 = vmax.f32 %v283, 0.0
    %v287 = vld [vmem:[#allocation2] sm:$0xff]
    %v288 = vld [vmem:[#allocation2 + $0x8] sm:$0xff]
    %v289 = vld [vmem:[#allocation2 + $0x10] sm:$0xff]
    %v290 = vld [vmem:[#allocation2 + $0x18] sm:$0xff]
    %v291 = vrot.slane %v44, 3
    %v294 = vsel %vm131, %v286, 0
    %296 = vmatprep.subr.mxu0 0.0
    %297 = vmatpush1.msra.mxu0 %v287
    %298 = vmatprep.subr.mxu0 0.0
    %299 = vmatpush1.msra.mxu0 %v288
    %300 = vmatprep.subr.mxu0 0.0
    %301 = vmatpush1.msra.mxu0 %v289
    %302 = vmatprep.subr.mxu0 0.0
    %303 = vmatpush1.msra.mxu0 %v290
    %304 = vmatprep.subr.mxu0 0.0
    %305 = vmatpush1.msra.mxu0 0.0
    %306 = vmatprep.subr.mxu0 0.0
    %307 = vmatpush1.msra.mxu0 0.0
    %308 = vmatprep.subr.mxu0 0.0
    %309 = vmatpush1.msra.mxu0 0.0
    %310 = vmatprep.subr.mxu0 0.0
    %311 = vmatpush1.msra.mxu0 0.0
    %312 = vmatprep.subr.mxu0 0.0
    %313 = vmatpush1.msra.mxu0 0.0
    %314 = vmatprep.subr.mxu0 0.0
    %315 = vmatpush1.msra.mxu0 0.0
    %316 = vmatprep.subr.mxu0 0.0
    %317 = vmatpush1.msra.mxu0 0.0
    %318 = vmatprep.subr.mxu0 0.0
    %319 = vmatpush1.msra.mxu0 0.0
    %320 = vmatprep.subr.mxu0 0.0
    %321 = vmatpush1.msra.mxu0 0.0
    %322 = vmatprep.subr.mxu0 0.0
    %323 = vmatpush1.msra.mxu0 0.0
    %324 = vmatprep.subr.mxu0 0.0
    %325 = vmatpush1.msra.mxu0 0.0
    %326 = vmatprep.subr.mxu0 0.0
    %327 = vmatpush1.msra.mxu0 0.0
    %328 = vmatprep.subr.mxu0 0.0
    %329 = vmatpush1.msra.mxu0 0.0
    %330 = vmatprep.subr.mxu0 0.0
    %331 = vmatpush1.msra.mxu0 0.0
    %332 = vmatprep.subr.mxu0 0.0
    %333 = vmatpush1.msra.mxu0 0.0
    %334 = vmatprep.subr.mxu0 0.0
    %335 = vmatpush1.msra.mxu0 0.0
    %336 = vmatprep.subr.mxu0 0.0
    %337 = vmatpush1.msra.mxu0 0.0
    %338 = vmatprep.subr.mxu0 0.0
    %339 = vmatpush1.msra.mxu0 0.0
    %340 = vmatprep.subr.mxu0 0.0
    %341 = vmatpush1.msra.mxu0 0.0
    %342 = vmatprep.subr.mxu0 0.0
    %343 = vmatpush1.msra.mxu0 0.0
    %344 = vmatprep.subr.mxu0 0.0
    %345 = vmatpush1.msra.mxu0 0.0
    %346 = vmatprep.subr.mxu0 0.0
    %347 = vmatpush1.msra.mxu0 0.0
    %348 = vmatprep.subr.mxu0 0.0
    %349 = vmatpush1.msra.mxu0 0.0
    %350 = vmatprep.subr.mxu0 0.0
    %351 = vmatpush1.msra.mxu0 0.0
    %352 = vmatprep.subr.mxu0 0.0
    %353 = vmatpush1.msra.mxu0 0.0
    %354 = vmatprep.subr.mxu0 0.0
    %355 = vmatpush1.msra.mxu0 0.0
    %356 = vmatprep.subr.mxu0 0.0
    %357 = vmatpush1.msra.mxu0 0.0
    %358 = vmatprep.subr.mxu0 0.0
    %359 = vmatpush1.msra.mxu0 0.0
    %360 = vmatprep.mubr.f32.mxu0 0.0
    %361 = vmatmul.mubr.f32.gmra.mrb[0].mxu0 %v294
    %v362 = vpop.f32.mrb[0].mxu0
    %v363 = vadd.f32 %v291, %v362
    %v364 = vpop.f32.mrb[0].mxu0
    %365 = vdwg.mxu0
    %v366 = vmax.f32 %v363, 0.0
    %v367 = vadd.f32 %v47, %v366
    %v368 = vld [vmem:[%s2] sm:$0xff]
    %v369 = vld [vmem:[%s2 + $0x8] sm:$0xff]
    %v370 = vld [vmem:[%s2 + $0x10] sm:$0xff]
    %v371 = vld [vmem:[%s2 + $0x18] sm:$0xff]
    %v372 = vld [vmem:[%s2 + $0x20] sm:$0xff]
    %v373 = vrot.slane %v44, 4
    %vm375 = vcmask 326656
    %v377 = vsel %vm375, %v367, 0
    %379 = vmatprep.subr.mxu0 0.0
    %380 = vmatpush1.msra.mxu0 %v368
    %381 = vmatprep.subr.mxu0 0.0
    %382 = vmatpush1.msra.mxu0 %v369
    %383 = vmatprep.subr.mxu0 0.0
    %384 = vmatpush1.msra.mxu0 %v370
    %385 = vmatprep.subr.mxu0 0.0
    %386 = vmatpush1.msra.mxu0 %v371
    %387 = vmatprep.subr.mxu0 0.0
    %388 = vmatpush1.msra.mxu0 %v372
    %389 = vmatprep.subr.mxu0 0.0
    %390 = vmatpush1.msra.mxu0 0.0
    %391 = vmatprep.subr.mxu0 0.0
    %392 = vmatpush1.msra.mxu0 0.0
    %393 = vmatprep.subr.mxu0 0.0
    %394 = vmatpush1.msra.mxu0 0.0
    %395 = vmatprep.subr.mxu0 0.0
    %396 = vmatpush1.msra.mxu0 0.0
    %397 = vmatprep.subr.mxu0 0.0
    %398 = vmatpush1.msra.mxu0 0.0
    %399 = vmatprep.subr.mxu0 0.0
    %400 = vmatpush1.msra.mxu0 0.0
    %401 = vmatprep.subr.mxu0 0.0
    %402 = vmatpush1.msra.mxu0 0.0
    %403 = vmatprep.subr.mxu0 0.0
    %404 = vmatpush1.msra.mxu0 0.0
    %405 = vmatprep.subr.mxu0 0.0
    %406 = vmatpush1.msra.mxu0 0.0
    %407 = vmatprep.subr.mxu0 0.0
    %408 = vmatpush1.msra.mxu0 0.0
    %409 = vmatprep.subr.mxu0 0.0
    %410 = vmatpush1.msra.mxu0 0.0
    %411 = vmatprep.subr.mxu0 0.0
    %412 = vmatpush1.msra.mxu0 0.0
    %413 = vmatprep.subr.mxu0 0.0
    %414 = vmatpush1.msra.mxu0 0.0
    %415 = vmatprep.subr.mxu0 0.0
    %416 = vmatpush1.msra.mxu0 0.0
    %417 = vmatprep.subr.mxu0 0.0
    %418 = vmatpush1.msra.mxu0 0.0
    %419 = vmatprep.subr.mxu0 0.0
    %420 = vmatpush1.msra.mxu0 0.0
    %421 = vmatprep.subr.mxu0 0.0
    %422 = vmatpush1.msra.mxu0 0.0
    %423 = vmatprep.subr.mxu0 0.0
    %424 = vmatpush1.msra.mxu0 0.0
    %425 = vmatprep.subr.mxu0 0.0
    %426 = vmatpush1.msra.mxu0 0.0
    %427 = vmatprep.subr.mxu0 0.0
    %428 = vmatpush1.msra.mxu0 0.0
    %429 = vmatprep.subr.mxu0 0.0
    %430 = vmatpush1.msra.mxu0 0.0
    %431 = vmatprep.subr.mxu0 0.0
    %432 = vmatpush1.msra.mxu0 0.0
    %433 = vmatprep.subr.mxu0 0.0
    %434 = vmatpush1.msra.mxu0 0.0
    %435 = vmatprep.subr.mxu0 0.0
    %436 = vmatpush1.msra.mxu0 0.0
    %437 = vmatprep.subr.mxu0 0.0
    %438 = vmatpush1.msra.mxu0 0.0
    %439 = vmatprep.subr.mxu0 0.0
    %440 = vmatpush1.msra.mxu0 0.0
    %441 = vmatprep.subr.mxu0 0.0
    %442 = vmatpush1.msra.mxu0 0.0
    %443 = vmatprep.mubr.f32.mxu0 0.0
    %444 = vmatmul.mubr.f32.gmra.mrb[0].mxu0 %v377
    %v445 = vpop.f32.mrb[0].mxu0
    %v446 = vadd.f32 %v373, %v445
    %v447 = vpop.f32.mrb[0].mxu0
    %448 = vdwg.mxu0
    %v449 = vmax.f32 %v446, 0.0
    %s450 = scalar_lea.vmem %s5, 64
    %v451 = vld [vmem:[%s450] sm:$0xff]
    %v452 = vld [vmem:[%s450 + $0x8] sm:$0xff]
    %v453 = vld [vmem:[%s450 + $0x10] sm:$0xff]
    %v454 = vld [vmem:[%s450 + $0x18] sm:$0xff]
    %v455 = vrot.slane %v44, 5
    %v458 = vsel %vm131, %v449, 0
    %460 = vmatprep.subr.mxu0 0.0
    %461 = vmatpush1.msra.mxu0 %v451
    %462 = vmatprep.subr.mxu0 0.0
    %463 = vmatpush1.msra.mxu0 %v452
    %464 = vmatprep.subr.mxu0 0.0
    %465 = vmatpush1.msra.mxu0 %v453
    %466 = vmatprep.subr.mxu0 0.0
    %467 = vmatpush1.msra.mxu0 %v454
    %468 = vmatprep.subr.mxu0 0.0
    %469 = vmatpush1.msra.mxu0 0.0
    %470 = vmatprep.subr.mxu0 0.0
    %471 = vmatpush1.msra.mxu0 0.0
    %472 = vmatprep.subr.mxu0 0.0
    %473 = vmatpush1.msra.mxu0 0.0
    %474 = vmatprep.subr.mxu0 0.0
    %475 = vmatpush1.msra.mxu0 0.0
    %476 = vmatprep.subr.mxu0 0.0
    %477 = vmatpush1.msra.mxu0 0.0
    %478 = vmatprep.subr.mxu0 0.0
    %479 = vmatpush1.msra.mxu0 0.0
    %480 = vmatprep.subr.mxu0 0.0
    %481 = vmatpush1.msra.mxu0 0.0
    %482 = vmatprep.subr.mxu0 0.0
    %483 = vmatpush1.msra.mxu0 0.0
    %484 = vmatprep.subr.mxu0 0.0
    %485 = vmatpush1.msra.mxu0 0.0
    %486 = vmatprep.subr.mxu0 0.0
    %487 = vmatpush1.msra.mxu0 0.0
    %488 = vmatprep.subr.mxu0 0.0
    %489 = vmatpush1.msra.mxu0 0.0
    %490 = vmatprep.subr.mxu0 0.0
    %491 = vmatpush1.msra.mxu0 0.0
    %492 = vmatprep.subr.mxu0 0.0
    %493 = vmatpush1.msra.mxu0 0.0
    %494 = vmatprep.subr.mxu0 0.0
    %495 = vmatpush1.msra.mxu0 0.0
    %496 = vmatprep.subr.mxu0 0.0
    %497 = vmatpush1.msra.mxu0 0.0
    %498 = vmatprep.subr.mxu0 0.0
    %499 = vmatpush1.msra.mxu0 0.0
    %500 = vmatprep.subr.mxu0 0.0
    %501 = vmatpush1.msra.mxu0 0.0
    %502 = vmatprep.subr.mxu0 0.0
    %503 = vmatpush1.msra.mxu0 0.0
    %504 = vmatprep.subr.mxu0 0.0
    %505 = vmatpush1.msra.mxu0 0.0
    %506 = vmatprep.subr.mxu0 0.0
    %507 = vmatpush1.msra.mxu0 0.0
    %508 = vmatprep.subr.mxu0 0.0
    %509 = vmatpush1.msra.mxu0 0.0
    %510 = vmatprep.subr.mxu0 0.0
    %511 = vmatpush1.msra.mxu0 0.0
    %512 = vmatprep.subr.mxu0 0.0
    %513 = vmatpush1.msra.mxu0 0.0
    %514 = vmatprep.subr.mxu0 0.0
    %515 = vmatpush1.msra.mxu0 0.0
    %516 = vmatprep.subr.mxu0 0.0
    %517 = vmatpush1.msra.mxu0 0.0
    %518 = vmatprep.subr.mxu0 0.0
    %519 = vmatpush1.msra.mxu0 0.0
    %520 = vmatprep.subr.mxu0 0.0
    %521 = vmatpush1.msra.mxu0 0.0
    %522 = vmatprep.subr.mxu0 0.0
    %523 = vmatpush1.msra.mxu0 0.0
    %524 = vmatprep.mubr.f32.mxu0 0.0
    %525 = vmatmul.mubr.f32.gmra.mrb[0].mxu0 %v458
    %v526 = vpop.f32.mrb[0].mxu0
    %v527 = vadd.f32 %v455, %v526
    %v528 = vpop.f32.mrb[0].mxu0
    %529 = vdwg.mxu0
    %v530 = vmax.f32 %v527, 0.0
    %s531 = scalar_lea.vmem %s5, 96
    %v532 = vld [vmem:[%s531] sm:$0xff]
    %v533 = vld [vmem:[%s531 + $0x8] sm:$0xff]
    %v534 = vld [vmem:[%s531 + $0x10] sm:$0xff]
    %v535 = vld [vmem:[%s531 + $0x18] sm:$0xff]
    %v536 = vrot.slane %v44, 6
    %v539 = vsel %vm131, %v530, 0
    %541 = vmatprep.subr.mxu0 0.0
    %542 = vmatpush1.msra.mxu0 %v532
    %543 = vmatprep.subr.mxu0 0.0
    %544 = vmatpush1.msra.mxu0 %v533
    %545 = vmatprep.subr.mxu0 0.0
    %546 = vmatpush1.msra.mxu0 %v534
    %547 = vmatprep.subr.mxu0 0.0
    %548 = vmatpush1.msra.mxu0 %v535
    %549 = vmatprep.subr.mxu0 0.0
    %550 = vmatpush1.msra.mxu0 0.0
    %551 = vmatprep.subr.mxu0 0.0
    %552 = vmatpush1.msra.mxu0 0.0
    %553 = vmatprep.subr.mxu0 0.0
    %554 = vmatpush1.msra.mxu0 0.0
    %555 = vmatprep.subr.mxu0 0.0
    %556 = vmatpush1.msra.mxu0 0.0
    %557 = vmatprep.subr.mxu0 0.0
    %558 = vmatpush1.msra.mxu0 0.0
    %559 = vmatprep.subr.mxu0 0.0
    %560 = vmatpush1.msra.mxu0 0.0
    %561 = vmatprep.subr.mxu0 0.0
    %562 = vmatpush1.msra.mxu0 0.0
    %563 = vmatprep.subr.mxu0 0.0
    %564 = vmatpush1.msra.mxu0 0.0
    %565 = vmatprep.subr.mxu0 0.0
    %566 = vmatpush1.msra.mxu0 0.0
    %567 = vmatprep.subr.mxu0 0.0
    %568 = vmatpush1.msra.mxu0 0.0
    %569 = vmatprep.subr.mxu0 0.0
    %570 = vmatpush1.msra.mxu0 0.0
    %571 = vmatprep.subr.mxu0 0.0
    %572 = vmatpush1.msra.mxu0 0.0
    %573 = vmatprep.subr.mxu0 0.0
    %574 = vmatpush1.msra.mxu0 0.0
    %575 = vmatprep.subr.mxu0 0.0
    %576 = vmatpush1.msra.mxu0 0.0
    %577 = vmatprep.subr.mxu0 0.0
    %578 = vmatpush1.msra.mxu0 0.0
    %579 = vmatprep.subr.mxu0 0.0
    %580 = vmatpush1.msra.mxu0 0.0
    %581 = vmatprep.subr.mxu0 0.0
    %582 = vmatpush1.msra.mxu0 0.0
    %583 = vmatprep.subr.mxu0 0.0
    %584 = vmatpush1.msra.mxu0 0.0
    %585 = vmatprep.subr.mxu0 0.0
    %586 = vmatpush1.msra.mxu0 0.0
    %587 = vmatprep.subr.mxu0 0.0
    %588 = vmatpush1.msra.mxu0 0.0
    %589 = vmatprep.subr.mxu0 0.0
    %590 = vmatpush1.msra.mxu0 0.0
    %591 = vmatprep.subr.mxu0 0.0
    %592 = vmatpush1.msra.mxu0 0.0
    %593 = vmatprep.subr.mxu0 0.0
    %594 = vmatpush1.msra.mxu0 0.0
    %595 = vmatprep.subr.mxu0 0.0
    %596 = vmatpush1.msra.mxu0 0.0
    %597 = vmatprep.subr.mxu0 0.0
    %598 = vmatpush1.msra.mxu0 0.0
    %599 = vmatprep.subr.mxu0 0.0
    %600 = vmatpush1.msra.mxu0 0.0
    %601 = vmatprep.subr.mxu0 0.0
    %602 = vmatpush1.msra.mxu0 0.0
    %603 = vmatprep.subr.mxu0 0.0
    %604 = vmatpush1.msra.mxu0 0.0
    %605 = vmatprep.mubr.f32.mxu0 0.0
    %606 = vmatmul.mubr.f32.gmra.mrb[0].mxu0 %v539
    %v607 = vpop.f32.mrb[0].mxu0
    %v608 = vadd.f32 %v536, %v607
    %v609 = vpop.f32.mrb[0].mxu0
    %610 = vdwg.mxu0
    %v611 = vmax.f32 %v608, 0.0
    %s612 = scalar_lea.vmem [#allocation2], 32
    %v613 = vld [vmem:[%s612] sm:$0xff]
    %v614 = vld [vmem:[%s612 + $0x8] sm:$0xff]
    %v615 = vld [vmem:[%s612 + $0x10] sm:$0xff]
    %v616 = vld [vmem:[%s612 + $0x18] sm:$0xff]
    %v617 = vrot.slane %v44, 7
    %v620 = vsel %vm131, %v611, 0
    %622 = vmatprep.subr.mxu0 0.0
    %623 = vmatpush1.msra.mxu0 %v613
    %624 = vmatprep.subr.mxu0 0.0
    %625 = vmatpush1.msra.mxu0 %v614
    %626 = vmatprep.subr.mxu0 0.0
    %627 = vmatpush1.msra.mxu0 %v615
    %628 = vmatprep.subr.mxu0 0.0
    %629 = vmatpush1.msra.mxu0 %v616
    %630 = vmatprep.subr.mxu0 0.0
    %631 = vmatpush1.msra.mxu0 0.0
    %632 = vmatprep.subr.mxu0 0.0
    %633 = vmatpush1.msra.mxu0 0.0
    %634 = vmatprep.subr.mxu0 0.0
    %635 = vmatpush1.msra.mxu0 0.0
    %636 = vmatprep.subr.mxu0 0.0
    %637 = vmatpush1.msra.mxu0 0.0
    %638 = vmatprep.subr.mxu0 0.0
    %639 = vmatpush1.msra.mxu0 0.0
    %640 = vmatprep.subr.mxu0 0.0
    %641 = vmatpush1.msra.mxu0 0.0
    %642 = vmatprep.subr.mxu0 0.0
    %643 = vmatpush1.msra.mxu0 0.0
    %644 = vmatprep.subr.mxu0 0.0
    %645 = vmatpush1.msra.mxu0 0.0
    %646 = vmatprep.subr.mxu0 0.0
    %647 = vmatpush1.msra.mxu0 0.0
    %648 = vmatprep.subr.mxu0 0.0
    %649 = vmatpush1.msra.mxu0 0.0
    %650 = vmatprep.subr.mxu0 0.0
    %651 = vmatpush1.msra.mxu0 0.0
    %652 = vmatprep.subr.mxu0 0.0
    %653 = vmatpush1.msra.mxu0 0.0
    %654 = vmatprep.subr.mxu0 0.0
    %655 = vmatpush1.msra.mxu0 0.0
    %656 = vmatprep.subr.mxu0 0.0
    %657 = vmatpush1.msra.mxu0 0.0
    %658 = vmatprep.subr.mxu0 0.0
    %659 = vmatpush1.msra.mxu0 0.0
    %660 = vmatprep.subr.mxu0 0.0
    %661 = vmatpush1.msra.mxu0 0.0
    %662 = vmatprep.subr.mxu0 0.0
    %663 = vmatpush1.msra.mxu0 0.0
    %664 = vmatprep.subr.mxu0 0.0
    %665 = vmatpush1.msra.mxu0 0.0
    %666 = vmatprep.subr.mxu0 0.0
    %667 = vmatpush1.msra.mxu0 0.0
    %668 = vmatprep.subr.mxu0 0.0
    %669 = vmatpush1.msra.mxu0 0.0
    %670 = vmatprep.subr.mxu0 0.0
    %671 = vmatpush1.msra.mxu0 0.0
    %672 = vmatprep.subr.mxu0 0.0
    %673 = vmatpush1.msra.mxu0 0.0
    %674 = vmatprep.subr.mxu0 0.0
    %675 = vmatpush1.msra.mxu0 0.0
    %676 = vmatprep.subr.mxu0 0.0
    %677 = vmatpush1.msra.mxu0 0.0
    %678 = vmatprep.subr.mxu0 0.0
    %679 = vmatpush1.msra.mxu0 0.0
    %680 = vmatprep.subr.mxu0 0.0
    %681 = vmatpush1.msra.mxu0 0.0
    %682 = vmatprep.subr.mxu0 0.0
    %683 = vmatpush1.msra.mxu0 0.0
    %684 = vmatprep.subr.mxu0 0.0
    %685 = vmatpush1.msra.mxu0 0.0
    %686 = vmatprep.mubr.f32.mxu0 0.0
    %687 = vmatmul.mubr.f32.gmra.mrb[0].mxu0 %v620
    %v688 = vpop.f32.mrb[0].mxu0
    %v689 = vadd.f32 %v617, %v688
    %v690 = vpop.f32.mrb[0].mxu0
    %691 = vdwg.mxu0
    %v692 = vmax.f32 %v689, 0.0
    %v693 = vadd.f32 %v367, %v692
    %v694 = vld [vmem:[%s3] sm:$0xff]
    %v695 = vld [vmem:[%s3 + $0x8] sm:$0xff]
    %v696 = vld [vmem:[%s3 + $0x10] sm:$0xff]
    %v697 = vld [vmem:[%s3 + $0x18] sm:$0xff]
    %v698 = vld [vmem:[%s3 + $0x20] sm:$0xff]
    %v699 = vld [vmem:[%s3 + $0x28] sm:$0xff]
    %v700 = vld [vmem:[%s3 + $0x30] sm:$0xff]
    %v701 = vld [vmem:[%s3 + $0x38] sm:$0xff]
    %v702 = vld [vmem:[%s3 + $0x40] sm:$0xff]
    %vm703 = vcmask 588800
    %v705 = vsel %vm703, %v693, 0
    %707 = vmatprep.subr.mxu0 0.0
    %708 = vmatpush1.msra.mxu0 %v694
    %709 = vmatprep.subr.mxu0 0.0
    %710 = vmatpush1.msra.mxu0 %v695
    %711 = vmatprep.subr.mxu0 0.0
    %712 = vmatpush1.msra.mxu0 %v696
    %713 = vmatprep.subr.mxu0 0.0
    %714 = vmatpush1.msra.mxu0 %v697
    %715 = vmatprep.subr.mxu0 0.0
    %716 = vmatpush1.msra.mxu0 %v698
    %717 = vmatprep.subr.mxu0 0.0
    %718 = vmatpush1.msra.mxu0 %v699
    %719 = vmatprep.subr.mxu0 0.0
    %720 = vmatpush1.msra.mxu0 %v700
    %721 = vmatprep.subr.mxu0 0.0
    %722 = vmatpush1.msra.mxu0 %v701
    %723 = vmatprep.subr.mxu0 0.0
    %724 = vmatpush1.msra.mxu0 %v702
    %725 = vmatprep.subr.mxu0 0.0
    %726 = vmatpush1.msra.mxu0 0.0
    %727 = vmatprep.subr.mxu0 0.0
    %728 = vmatpush1.msra.mxu0 0.0
    %729 = vmatprep.subr.mxu0 0.0
    %730 = vmatpush1.msra.mxu0 0.0
    %731 = vmatprep.subr.mxu0 0.0
    %732 = vmatpush1.msra.mxu0 0.0
    %733 = vmatprep.subr.mxu0 0.0
    %734 = vmatpush1.msra.mxu0 0.0
    %735 = vmatprep.subr.mxu0 0.0
    %736 = vmatpush1.msra.mxu0 0.0
    %737 = vmatprep.subr.mxu0 0.0
    %738 = vmatpush1.msra.mxu0 0.0
    %739 = vmatprep.subr.mxu0 0.0
    %740 = vmatpush1.msra.mxu0 0.0
    %741 = vmatprep.subr.mxu0 0.0
    %742 = vmatpush1.msra.mxu0 0.0
    %743 = vmatprep.subr.mxu0 0.0
    %744 = vmatpush1.msra.mxu0 0.0
    %745 = vmatprep.subr.mxu0 0.0
    %746 = vmatpush1.msra.mxu0 0.0
    %747 = vmatprep.subr.mxu0 0.0
    %748 = vmatpush1.msra.mxu0 0.0
    %749 = vmatprep.subr.mxu0 0.0
    %750 = vmatpush1.msra.mxu0 0.0
    %751 = vmatprep.subr.mxu0 0.0
    %752 = vmatpush1.msra.mxu0 0.0
    %753 = vmatprep.subr.mxu0 0.0
    %754 = vmatpush1.msra.mxu0 0.0
    %755 = vmatprep.subr.mxu0 0.0
    %756 = vmatpush1.msra.mxu0 0.0
    %757 = vmatprep.subr.mxu0 0.0
    %758 = vmatpush1.msra.mxu0 0.0
    %759 = vmatprep.subr.mxu0 0.0
    %760 = vmatpush1.msra.mxu0 0.0
    %761 = vmatprep.subr.mxu0 0.0
    %762 = vmatpush1.msra.mxu0 0.0
    %763 = vmatprep.subr.mxu0 0.0
    %764 = vmatpush1.msra.mxu0 0.0
    %765 = vmatprep.subr.mxu0 0.0
    %766 = vmatpush1.msra.mxu0 0.0
    %767 = vmatprep.subr.mxu0 0.0
    %768 = vmatpush1.msra.mxu0 0.0
    %769 = vmatprep.subr.mxu0 0.0
    %770 = vmatpush1.msra.mxu0 0.0
    %771 = vmatprep.mubr.f32.mxu0 0.0
    %772 = vmatmul.mubr.f32.gmra.mrb[0].mxu0 %v705
    %v773 = vpop.f32.mrb[0].mxu0
    %v774 = vadd.f32 %v45, %v773
    %v775 = vpop.f32.mrb[0].mxu0
    %776 = vdwg.mxu0
    %v777 = vmax.f32 %v774, 0.0
    %s778 = scalar_lea.vmem %s5, 128
    %v779 = vld [vmem:[%s778] sm:$0xff]
    %v780 = vld [vmem:[%s778 + $0x8] sm:$0xff]
    %v781 = vld [vmem:[%s778 + $0x10] sm:$0xff]
    %v782 = vld [vmem:[%s778 + $0x18] sm:$0xff]
    %v784 = vrot.slane %v45, 1
    %v787 = vsel %vm131, %v777, 0
    %789 = vmatprep.subr.mxu0 0.0
    %790 = vmatpush1.msra.mxu0 %v779
    %791 = vmatprep.subr.mxu0 0.0
    %792 = vmatpush1.msra.mxu0 %v780
    %793 = vmatprep.subr.mxu0 0.0
    %794 = vmatpush1.msra.mxu0 %v781
    %795 = vmatprep.subr.mxu0 0.0
    %796 = vmatpush1.msra.mxu0 %v782
    %797 = vmatprep.subr.mxu0 0.0
    %798 = vmatpush1.msra.mxu0 0.0
    %799 = vmatprep.subr.mxu0 0.0
    %800 = vmatpush1.msra.mxu0 0.0
    %801 = vmatprep.subr.mxu0 0.0
    %802 = vmatpush1.msra.mxu0 0.0
    %803 = vmatprep.subr.mxu0 0.0
    %804 = vmatpush1.msra.mxu0 0.0
    %805 = vmatprep.subr.mxu0 0.0
    %806 = vmatpush1.msra.mxu0 0.0
    %807 = vmatprep.subr.mxu0 0.0
    %808 = vmatpush1.msra.mxu0 0.0
    %809 = vmatprep.subr.mxu0 0.0
    %810 = vmatpush1.msra.mxu0 0.0
    %811 = vmatprep.subr.mxu0 0.0
    %812 = vmatpush1.msra.mxu0 0.0
    %813 = vmatprep.subr.mxu0 0.0
    %814 = vmatpush1.msra.mxu0 0.0
    %815 = vmatprep.subr.mxu0 0.0
    %816 = vmatpush1.msra.mxu0 0.0
    %817 = vmatprep.subr.mxu0 0.0
    %818 = vmatpush1.msra.mxu0 0.0
    %819 = vmatprep.subr.mxu0 0.0
    %820 = vmatpush1.msra.mxu0 0.0
    %821 = vmatprep.subr.mxu0 0.0
    %822 = vmatpush1.msra.mxu0 0.0
    %823 = vmatprep.subr.mxu0 0.0
    %824 = vmatpush1.msra.mxu0 0.0
    %825 = vmatprep.subr.mxu0 0.0
    %826 = vmatpush1.msra.mxu0 0.0
    %827 = vmatprep.subr.mxu0 0.0
    %828 = vmatpush1.msra.mxu0 0.0
    %829 = vmatprep.subr.mxu0 0.0
    %830 = vmatpush1.msra.mxu0 0.0
    %831 = vmatprep.subr.mxu0 0.0
    %832 = vmatpush1.msra.mxu0 0.0
    %833 = vmatprep.subr.mxu0 0.0
    %834 = vmatpush1.msra.mxu0 0.0
    %835 = vmatprep.subr.mxu0 0.0
    %836 = vmatpush1.msra.mxu0 0.0
    %837 = vmatprep.subr.mxu0 0.0
    %838 = vmatpush1.msra.mxu0 0.0
    %839 = vmatprep.subr.mxu0 0.0
    %840 = vmatpush1.msra.mxu0 0.0
    %841 = vmatprep.subr.mxu0 0.0
    %842 = vmatpush1.msra.mxu0 0.0
    %843 = vmatprep.subr.mxu0 0.0
    %844 = vmatpush1.msra.mxu0 0.0
    %845 = vmatprep.subr.mxu0 0.0
    %846 = vmatpush1.msra.mxu0 0.0
    %847 = vmatprep.subr.mxu0 0.0
    %848 = vmatpush1.msra.mxu0 0.0
    %849 = vmatprep.subr.mxu0 0.0
    %850 = vmatpush1.msra.mxu0 0.0
    %851 = vmatprep.subr.mxu0 0.0
    %852 = vmatpush1.msra.mxu0 0.0
    %853 = vmatprep.mubr.f32.mxu0 0.0
    %854 = vmatmul.mubr.f32.gmra.mrb[0].mxu0 %v787
    %v855 = vpop.f32.mrb[0].mxu0
    %v856 = vadd.f32 %v784, %v855
    %v857 = vpop.f32.mrb[0].mxu0
    %858 = vdwg.mxu0
    %v859 = vmax.f32 %v856, 0.0
    %s860 = scalar_lea.vmem %s5, 160
    %v861 = vld [vmem:[%s860] sm:$0xff]
    %v862 = vld [vmem:[%s860 + $0x8] sm:$0xff]
    %v863 = vld [vmem:[%s860 + $0x10] sm:$0xff]
    %v864 = vld [vmem:[%s860 + $0x18] sm:$0xff]
    %v865 = vrot.slane %v45, 2
    %v868 = vsel %vm131, %v859, 0
    %870 = vmatprep.subr.mxu0 0.0
    %871 = vmatpush1.msra.mxu0 %v861
    %872 = vmatprep.subr.mxu0 0.0
    %873 = vmatpush1.msra.mxu0 %v862
    %874 = vmatprep.subr.mxu0 0.0
    %875 = vmatpush1.msra.mxu0 %v863
    %876 = vmatprep.subr.mxu0 0.0
    %877 = vmatpush1.msra.mxu0 %v864
    %878 = vmatprep.subr.mxu0 0.0
    %879 = vmatpush1.msra.mxu0 0.0
    %880 = vmatprep.subr.mxu0 0.0
    %881 = vmatpush1.msra.mxu0 0.0
    %882 = vmatprep.subr.mxu0 0.0
    %883 = vmatpush1.msra.mxu0 0.0
    %884 = vmatprep.subr.mxu0 0.0
    %885 = vmatpush1.msra.mxu0 0.0
    %886 = vmatprep.subr.mxu0 0.0
    %887 = vmatpush1.msra.mxu0 0.0
    %888 = vmatprep.subr.mxu0 0.0
    %889 = vmatpush1.msra.mxu0 0.0
    %890 = vmatprep.subr.mxu0 0.0
    %891 = vmatpush1.msra.mxu0 0.0
    %892 = vmatprep.subr.mxu0 0.0
    %893 = vmatpush1.msra.mxu0 0.0
    %894 = vmatprep.subr.mxu0 0.0
    %895 = vmatpush1.msra.mxu0 0.0
    %896 = vmatprep.subr.mxu0 0.0
    %897 = vmatpush1.msra.mxu0 0.0
    %898 = vmatprep.subr.mxu0 0.0
    %899 = vmatpush1.msra.mxu0 0.0
    %900 = vmatprep.subr.mxu0 0.0
    %901 = vmatpush1.msra.mxu0 0.0
    %902 = vmatprep.subr.mxu0 0.0
    %903 = vmatpush1.msra.mxu0 0.0
    %904 = vmatprep.subr.mxu0 0.0
    %905 = vmatpush1.msra.mxu0 0.0
    %906 = vmatprep.subr.mxu0 0.0
    %907 = vmatpush1.msra.mxu0 0.0
    %908 = vmatprep.subr.mxu0 0.0
    %909 = vmatpush1.msra.mxu0 0.0
    %910 = vmatprep.subr.mxu0 0.0
    %911 = vmatpush1.msra.mxu0 0.0
    %912 = vmatprep.subr.mxu0 0.0
    %913 = vmatpush1.msra.mxu0 0.0
    %914 = vmatprep.subr.mxu0 0.0
    %915 = vmatpush1.msra.mxu0 0.0
    %916 = vmatprep.subr.mxu0 0.0
    %917 = vmatpush1.msra.mxu0 0.0
    %918 = vmatprep.subr.mxu0 0.0
    %919 = vmatpush1.msra.mxu0 0.0
    %920 = vmatprep.subr.mxu0 0.0
    %921 = vmatpush1.msra.mxu0 0.0
    %922 = vmatprep.subr.mxu0 0.0
    %923 = vmatpush1.msra.mxu0 0.0
    %924 = vmatprep.subr.mxu0 0.0
    %925 = vmatpush1.msra.mxu0 0.0
    %926 = vmatprep.subr.mxu0 0.0
    %927 = vmatpush1.msra.mxu0 0.0
    %928 = vmatprep.subr.mxu0 0.0
    %929 = vmatpush1.msra.mxu0 0.0
    %930 = vmatprep.subr.mxu0 0.0
    %931 = vmatpush1.msra.mxu0 0.0
    %932 = vmatprep.subr.mxu0 0.0
    %933 = vmatpush1.msra.mxu0 0.0
    %934 = vmatprep.mubr.f32.mxu0 0.0
    %935 = vmatmul.mubr.f32.gmra.mrb[0].mxu0 %v868
    %v936 = vpop.f32.mrb[0].mxu0
    %v937 = vadd.f32 %v865, %v936
    %v938 = vpop.f32.mrb[0].mxu0
    %939 = vdwg.mxu0
    %v940 = vmax.f32 %v937, 0.0
    %s941 = scalar_lea.vmem [#allocation2], 64
    %v942 = vld [vmem:[%s941] sm:$0xff]
    %v943 = vld [vmem:[%s941 + $0x8] sm:$0xff]
    %v944 = vld [vmem:[%s941 + $0x10] sm:$0xff]
    %v945 = vld [vmem:[%s941 + $0x18] sm:$0xff]
    %v946 = vrot.slane %v45, 3
    %v949 = vsel %vm131, %v940, 0
    %951 = vmatprep.subr.mxu0 0.0
    %952 = vmatpush1.msra.mxu0 %v942
    %953 = vmatprep.subr.mxu0 0.0
    %954 = vmatpush1.msra.mxu0 %v943
    %955 = vmatprep.subr.mxu0 0.0
    %956 = vmatpush1.msra.mxu0 %v944
    %957 = vmatprep.subr.mxu0 0.0
    %958 = vmatpush1.msra.mxu0 %v945
    %959 = vmatprep.subr.mxu0 0.0
    %960 = vmatpush1.msra.mxu0 0.0
    %961 = vmatprep.subr.mxu0 0.0
    %962 = vmatpush1.msra.mxu0 0.0
    %963 = vmatprep.subr.mxu0 0.0
    %964 = vmatpush1.msra.mxu0 0.0
    %965 = vmatprep.subr.mxu0 0.0
    %966 = vmatpush1.msra.mxu0 0.0
    %967 = vmatprep.subr.mxu0 0.0
    %968 = vmatpush1.msra.mxu0 0.0
    %969 = vmatprep.subr.mxu0 0.0
    %970 = vmatpush1.msra.mxu0 0.0
    %971 = vmatprep.subr.mxu0 0.0
    %972 = vmatpush1.msra.mxu0 0.0
    %973 = vmatprep.subr.mxu0 0.0
    %974 = vmatpush1.msra.mxu0 0.0
    %975 = vmatprep.subr.mxu0 0.0
    %976 = vmatpush1.msra.mxu0 0.0
    %977 = vmatprep.subr.mxu0 0.0
    %978 = vmatpush1.msra.mxu0 0.0
    %979 = vmatprep.subr.mxu0 0.0
    %980 = vmatpush1.msra.mxu0 0.0
    %981 = vmatprep.subr.mxu0 0.0
    %982 = vmatpush1.msra.mxu0 0.0
    %983 = vmatprep.subr.mxu0 0.0
    %984 = vmatpush1.msra.mxu0 0.0
    %985 = vmatprep.subr.mxu0 0.0
    %986 = vmatpush1.msra.mxu0 0.0
    %987 = vmatprep.subr.mxu0 0.0
    %988 = vmatpush1.msra.mxu0 0.0
    %989 = vmatprep.subr.mxu0 0.0
    %990 = vmatpush1.msra.mxu0 0.0
    %991 = vmatprep.subr.mxu0 0.0
    %992 = vmatpush1.msra.mxu0 0.0
    %993 = vmatprep.subr.mxu0 0.0
    %994 = vmatpush1.msra.mxu0 0.0
    %995 = vmatprep.subr.mxu0 0.0
    %996 = vmatpush1.msra.mxu0 0.0
    %997 = vmatprep.subr.mxu0 0.0
    %998 = vmatpush1.msra.mxu0 0.0
    %999 = vmatprep.subr.mxu0 0.0
    %1000 = vmatpush1.msra.mxu0 0.0
    %1001 = vmatprep.subr.mxu0 0.0
    %1002 = vmatpush1.msra.mxu0 0.0
    %1003 = vmatprep.subr.mxu0 0.0
    %1004 = vmatpush1.msra.mxu0 0.0
    %1005 = vmatprep.subr.mxu0 0.0
    %1006 = vmatpush1.msra.mxu0 0.0
    %1007 = vmatprep.subr.mxu0 0.0
    %1008 = vmatpush1.msra.mxu0 0.0
    %1009 = vmatprep.subr.mxu0 0.0
    %1010 = vmatpush1.msra.mxu0 0.0
    %1011 = vmatprep.subr.mxu0 0.0
    %1012 = vmatpush1.msra.mxu0 0.0
    %1013 = vmatprep.subr.mxu0 0.0
    %1014 = vmatpush1.msra.mxu0 0.0
    %1015 = vmatprep.mubr.f32.mxu0 0.0
    %1016 = vmatmul.mubr.f32.gmra.mrb[0].mxu0 %v949
    %v1017 = vpop.f32.mrb[0].mxu0
    %v1018 = vadd.f32 %v946, %v1017
    %v1019 = vpop.f32.mrb[0].mxu0
    %1020 = vdwg.mxu0
    %v1021 = vmax.f32 %v1018, 0.0
    %v1022 = vadd.f32 %v693, %v1021
    %v1023 = vld [vmem:[%s4] sm:$0xff]
    %v1024 = vld [vmem:[%s4 + $0x8] sm:$0xff]
    %v1025 = vld [vmem:[%s4 + $0x10] sm:$0xff]
    %v1026 = vld [vmem:[%s4 + $0x18] sm:$0xff]
    %v1027 = vld [vmem:[%s4 + $0x20] sm:$0xff]
    %v1028 = vld [vmem:[%s4 + $0x28] sm:$0xff]
    %v1029 = vld [vmem:[%s4 + $0x30] sm:$0xff]
    %v1030 = vld [vmem:[%s4 + $0x38] sm:$0xff]
    %v1031 = vld [vmem:[%s4 + $0x40] sm:$0xff]
    %v1032 = vld [vmem:[%s4 + $0x48] sm:$0xff]
    %v1033 = vld [vmem:[%s4 + $0x50] sm:$0xff]
    %v1034 = vld [vmem:[%s4 + $0x58] sm:$0xff]
    %v1035 = vld [vmem:[%s4 + $0x60] sm:$0xff]
    %v1036 = vrot.slane %v45, 4
    %vm1038 = vcmask 850944
    %v1040 = vsel %vm1038, %v1022, 0
    %1042 = vmatprep.subr.mxu0 0.0
    %1043 = vmatpush1.msra.mxu0 %v1023
    %1044 = vmatprep.subr.mxu0 0.0
    %1045 = vmatpush1.msra.mxu0 %v1024
    %1046 = vmatprep.subr.mxu0 0.0
    %1047 = vmatpush1.msra.mxu0 %v1025
    %1048 = vmatprep.subr.mxu0 0.0
    %1049 = vmatpush1.msra.mxu0 %v1026
    %1050 = vmatprep.subr.mxu0 0.0
    %1051 = vmatpush1.msra.mxu0 %v1027
    %1052 = vmatprep.subr.mxu0 0.0
    %1053 = vmatpush1.msra.mxu0 %v1028
    %1054 = vmatprep.subr.mxu0 0.0
    %1055 = vmatpush1.msra.mxu0 %v1029
    %1056 = vmatprep.subr.mxu0 0.0
    %1057 = vmatpush1.msra.mxu0 %v1030
    %1058 = vmatprep.subr.mxu0 0.0
    %1059 = vmatpush1.msra.mxu0 %v1031
    %1060 = vmatprep.subr.mxu0 0.0
    %1061 = vmatpush1.msra.mxu0 %v1032
    %1062 = vmatprep.subr.mxu0 0.0
    %1063 = vmatpush1.msra.mxu0 %v1033
    %1064 = vmatprep.subr.mxu0 0.0
    %1065 = vmatpush1.msra.mxu0 %v1034
    %1066 = vmatprep.subr.mxu0 0.0
    %1067 = vmatpush1.msra.mxu0 %v1035
    %1068 = vmatprep.subr.mxu0 0.0
    %1069 = vmatpush1.msra.mxu0 0.0
    %1070 = vmatprep.subr.mxu0 0.0
    %1071 = vmatpush1.msra.mxu0 0.0
    %1072 = vmatprep.subr.mxu0 0.0
    %1073 = vmatpush1.msra.mxu0 0.0
    %1074 = vmatprep.subr.mxu0 0.0
    %1075 = vmatpush1.msra.mxu0 0.0
    %1076 = vmatprep.subr.mxu0 0.0
    %1077 = vmatpush1.msra.mxu0 0.0
    %1078 = vmatprep.subr.mxu0 0.0
    %1079 = vmatpush1.msra.mxu0 0.0
    %1080 = vmatprep.subr.mxu0 0.0
    %1081 = vmatpush1.msra.mxu0 0.0
    %1082 = vmatprep.subr.mxu0 0.0
    %1083 = vmatpush1.msra.mxu0 0.0
    %1084 = vmatprep.subr.mxu0 0.0
    %1085 = vmatpush1.msra.mxu0 0.0
    %1086 = vmatprep.subr.mxu0 0.0
    %1087 = vmatpush1.msra.mxu0 0.0
    %1088 = vmatprep.subr.mxu0 0.0
    %1089 = vmatpush1.msra.mxu0 0.0
    %1090 = vmatprep.subr.mxu0 0.0
    %1091 = vmatpush1.msra.mxu0 0.0
    %1092 = vmatprep.subr.mxu0 0.0
    %1093 = vmatpush1.msra.mxu0 0.0
    %1094 = vmatprep.subr.mxu0 0.0
    %1095 = vmatpush1.msra.mxu0 0.0
    %1096 = vmatprep.subr.mxu0 0.0
    %1097 = vmatpush1.msra.mxu0 0.0
    %1098 = vmatprep.subr.mxu0 0.0
    %1099 = vmatpush1.msra.mxu0 0.0
    %1100 = vmatprep.subr.mxu0 0.0
    %1101 = vmatpush1.msra.mxu0 0.0
    %1102 = vmatprep.subr.mxu0 0.0
    %1103 = vmatpush1.msra.mxu0 0.0
    %1104 = vmatprep.subr.mxu0 0.0
    %1105 = vmatpush1.msra.mxu0 0.0
    %1106 = vmatprep.mubr.f32.mxu0 0.0
    %1107 = vmatmul.mubr.f32.gmra.mrb[0].mxu0 %v1040
    %v1108 = vpop.f32.mrb[0].mxu0
    %v1109 = vadd.f32 %v1036, %v1108
    %v1110 = vpop.f32.mrb[0].mxu0
    %1111 = vdwg.mxu0
    %v1112 = vmax.f32 %v1109, 0.0
    %s1113 = scalar_lea.vmem %s5, 192
    %v1114 = vld [vmem:[%s1113] sm:$0xff]
    %v1115 = vld [vmem:[%s1113 + $0x8] sm:$0xff]
    %v1116 = vld [vmem:[%s1113 + $0x10] sm:$0xff]
    %v1117 = vld [vmem:[%s1113 + $0x18] sm:$0xff]
    %v1118 = vrot.slane %v45, 5
    %v1121 = vsel %vm131, %v1112, 0
    %1123 = vmatprep.subr.mxu0 0.0
    %1124 = vmatpush1.msra.mxu0 %v1114
    %1125 = vmatprep.subr.mxu0 0.0
    %1126 = vmatpush1.msra.mxu0 %v1115
    %1127 = vmatprep.subr.mxu0 0.0
    %1128 = vmatpush1.msra.mxu0 %v1116
    %1129 = vmatprep.subr.mxu0 0.0
    %1130 = vmatpush1.msra.mxu0 %v1117
    %1131 = vmatprep.subr.mxu0 0.0
    %1132 = vmatpush1.msra.mxu0 0.0
    %1133 = vmatprep.subr.mxu0 0.0
    %1134 = vmatpush1.msra.mxu0 0.0
    %1135 = vmatprep.subr.mxu0 0.0
    %1136 = vmatpush1.msra.mxu0 0.0
    %1137 = vmatprep.subr.mxu0 0.0
    %1138 = vmatpush1.msra.mxu0 0.0
    %1139 = vmatprep.subr.mxu0 0.0
    %1140 = vmatpush1.msra.mxu0 0.0
    %1141 = vmatprep.subr.mxu0 0.0
    %1142 = vmatpush1.msra.mxu0 0.0
    %1143 = vmatprep.subr.mxu0 0.0
    %1144 = vmatpush1.msra.mxu0 0.0
    %1145 = vmatprep.subr.mxu0 0.0
    %1146 = vmatpush1.msra.mxu0 0.0
    %1147 = vmatprep.subr.mxu0 0.0
    %1148 = vmatpush1.msra.mxu0 0.0
    %1149 = vmatprep.subr.mxu0 0.0
    %1150 = vmatpush1.msra.mxu0 0.0
    %1151 = vmatprep.subr.mxu0 0.0
    %1152 = vmatpush1.msra.mxu0 0.0
    %1153 = vmatprep.subr.mxu0 0.0
    %1154 = vmatpush1.msra.mxu0 0.0
    %1155 = vmatprep.subr.mxu0 0.0
    %1156 = vmatpush1.msra.mxu0 0.0
    %1157 = vmatprep.subr.mxu0 0.0
    %1158 = vmatpush1.msra.mxu0 0.0
    %1159 = vmatprep.subr.mxu0 0.0
    %1160 = vmatpush1.msra.mxu0 0.0
    %1161 = vmatprep.subr.mxu0 0.0
    %1162 = vmatpush1.msra.mxu0 0.0
    %1163 = vmatprep.subr.mxu0 0.0
    %1164 = vmatpush1.msra.mxu0 0.0
    %1165 = vmatprep.subr.mxu0 0.0
    %1166 = vmatpush1.msra.mxu0 0.0
    %1167 = vmatprep.subr.mxu0 0.0
    %1168 = vmatpush1.msra.mxu0 0.0
    %1169 = vmatprep.subr.mxu0 0.0
    %1170 = vmatpush1.msra.mxu0 0.0
    %1171 = vmatprep.subr.mxu0 0.0
    %1172 = vmatpush1.msra.mxu0 0.0
    %1173 = vmatprep.subr.mxu0 0.0
    %1174 = vmatpush1.msra.mxu0 0.0
    %1175 = vmatprep.subr.mxu0 0.0
    %1176 = vmatpush1.msra.mxu0 0.0
    %1177 = vmatprep.subr.mxu0 0.0
    %1178 = vmatpush1.msra.mxu0 0.0
    %1179 = vmatprep.subr.mxu0 0.0
    %1180 = vmatpush1.msra.mxu0 0.0
    %1181 = vmatprep.subr.mxu0 0.0
    %1182 = vmatpush1.msra.mxu0 0.0
    %1183 = vmatprep.subr.mxu0 0.0
    %1184 = vmatpush1.msra.mxu0 0.0
    %1185 = vmatprep.subr.mxu0 0.0
    %1186 = vmatpush1.msra.mxu0 0.0
    %1187 = vmatprep.mubr.f32.mxu0 0.0
    %1188 = vmatmul.mubr.f32.gmra.mrb[0].mxu0 %v1121
    %v1189 = vpop.f32.mrb[0].mxu0
    %v1190 = vadd.f32 %v1118, %v1189
    %v1191 = vpop.f32.mrb[0].mxu0
    %1192 = vdwg.mxu0
    %v1193 = vmax.f32 %v1190, 0.0
    %s1194 = scalar_lea.vmem %s5, 224
    %v1195 = vld [vmem:[%s1194] sm:$0xff]
    %v1196 = vld [vmem:[%s1194 + $0x8] sm:$0xff]
    %v1197 = vld [vmem:[%s1194 + $0x10] sm:$0xff]
    %v1198 = vld [vmem:[%s1194 + $0x18] sm:$0xff]
    %v1199 = vrot.slane %v45, 6
    %v1202 = vsel %vm131, %v1193, 0
    %1204 = vmatprep.subr.mxu0 0.0
    %1205 = vmatpush1.msra.mxu0 %v1195
    %1206 = vmatprep.subr.mxu0 0.0
    %1207 = vmatpush1.msra.mxu0 %v1196
    %1208 = vmatprep.subr.mxu0 0.0
    %1209 = vmatpush1.msra.mxu0 %v1197
    %1210 = vmatprep.subr.mxu0 0.0
    %1211 = vmatpush1.msra.mxu0 %v1198
    %1212 = vmatprep.subr.mxu0 0.0
    %1213 = vmatpush1.msra.mxu0 0.0
    %1214 = vmatprep.subr.mxu0 0.0
    %1215 = vmatpush1.msra.mxu0 0.0
    %1216 = vmatprep.subr.mxu0 0.0
    %1217 = vmatpush1.msra.mxu0 0.0
    %1218 = vmatprep.subr.mxu0 0.0
    %1219 = vmatpush1.msra.mxu0 0.0
    %1220 = vmatprep.subr.mxu0 0.0
    %1221 = vmatpush1.msra.mxu0 0.0
    %1222 = vmatprep.subr.mxu0 0.0
    %1223 = vmatpush1.msra.mxu0 0.0
    %1224 = vmatprep.subr.mxu0 0.0
    %1225 = vmatpush1.msra.mxu0 0.0
    %1226 = vmatprep.subr.mxu0 0.0
    %1227 = vmatpush1.msra.mxu0 0.0
    %1228 = vmatprep.subr.mxu0 0.0
    %1229 = vmatpush1.msra.mxu0 0.0
    %1230 = vmatprep.subr.mxu0 0.0
    %1231 = vmatpush1.msra.mxu0 0.0
    %1232 = vmatprep.subr.mxu0 0.0
    %1233 = vmatpush1.msra.mxu0 0.0
    %1234 = vmatprep.subr.mxu0 0.0
    %1235 = vmatpush1.msra.mxu0 0.0
    %1236 = vmatprep.subr.mxu0 0.0
    %1237 = vmatpush1.msra.mxu0 0.0
    %1238 = vmatprep.subr.mxu0 0.0
    %1239 = vmatpush1.msra.mxu0 0.0
    %1240 = vmatprep.subr.mxu0 0.0
    %1241 = vmatpush1.msra.mxu0 0.0
    %1242 = vmatprep.subr.mxu0 0.0
    %1243 = vmatpush1.msra.mxu0 0.0
    %1244 = vmatprep.subr.mxu0 0.0
    %1245 = vmatpush1.msra.mxu0 0.0
    %1246 = vmatprep.subr.mxu0 0.0
    %1247 = vmatpush1.msra.mxu0 0.0
    %1248 = vmatprep.subr.mxu0 0.0
    %1249 = vmatpush1.msra.mxu0 0.0
    %1250 = vmatprep.subr.mxu0 0.0
    %1251 = vmatpush1.msra.mxu0 0.0
    %1252 = vmatprep.subr.mxu0 0.0
    %1253 = vmatpush1.msra.mxu0 0.0
    %1254 = vmatprep.subr.mxu0 0.0
    %1255 = vmatpush1.msra.mxu0 0.0
    %1256 = vmatprep.subr.mxu0 0.0
    %1257 = vmatpush1.msra.mxu0 0.0
    %1258 = vmatprep.subr.mxu0 0.0
    %1259 = vmatpush1.msra.mxu0 0.0
    %1260 = vmatprep.subr.mxu0 0.0
    %1261 = vmatpush1.msra.mxu0 0.0
    %1262 = vmatprep.subr.mxu0 0.0
    %1263 = vmatpush1.msra.mxu0 0.0
    %1264 = vmatprep.subr.mxu0 0.0
    %1265 = vmatpush1.msra.mxu0 0.0
    %1266 = vmatprep.subr.mxu0 0.0
    %1267 = vmatpush1.msra.mxu0 0.0
    %1268 = vmatprep.mubr.f32.mxu0 0.0
    %1269 = vmatmul.mubr.f32.gmra.mrb[0].mxu0 %v1202
    %v1270 = vpop.f32.mrb[0].mxu0
    %v1271 = vadd.f32 %v1199, %v1270
    %v1272 = vpop.f32.mrb[0].mxu0
    %1273 = vdwg.mxu0
    %v1274 = vmax.f32 %v1271, 0.0
    %s1275 = scalar_lea.vmem %s5, 256
    %v1276 = vld [vmem:[%s1275] sm:$0xff]
    %v1277 = vld [vmem:[%s1275 + $0x8] sm:$0xff]
    %v1278 = vld [vmem:[%s1275 + $0x10] sm:$0xff]
    %v1279 = vld [vmem:[%s1275 + $0x18] sm:$0xff]
    %v1280 = vrot.slane %v45, 7
    %v1283 = vsel %vm131, %v1274, 0
    %1285 = vmatprep.subr.mxu0 0.0
    %1286 = vmatpush1.msra.mxu0 %v1276
    %1287 = vmatprep.subr.mxu0 0.0
    %1288 = vmatpush1.msra.mxu0 %v1277
    %1289 = vmatprep.subr.mxu0 0.0
    %1290 = vmatpush1.msra.mxu0 %v1278
    %1291 = vmatprep.subr.mxu0 0.0
    %1292 = vmatpush1.msra.mxu0 %v1279
    %1293 = vmatprep.subr.mxu0 0.0
    %1294 = vmatpush1.msra.mxu0 0.0
    %1295 = vmatprep.subr.mxu0 0.0
    %1296 = vmatpush1.msra.mxu0 0.0
    %1297 = vmatprep.subr.mxu0 0.0
    %1298 = vmatpush1.msra.mxu0 0.0
    %1299 = vmatprep.subr.mxu0 0.0
    %1300 = vmatpush1.msra.mxu0 0.0
    %1301 = vmatprep.subr.mxu0 0.0
    %1302 = vmatpush1.msra.mxu0 0.0
    %1303 = vmatprep.subr.mxu0 0.0
    %1304 = vmatpush1.msra.mxu0 0.0
    %1305 = vmatprep.subr.mxu0 0.0
    %1306 = vmatpush1.msra.mxu0 0.0
    %1307 = vmatprep.subr.mxu0 0.0
    %1308 = vmatpush1.msra.mxu0 0.0
    %1309 = vmatprep.subr.mxu0 0.0
    %1310 = vmatpush1.msra.mxu0 0.0
    %1311 = vmatprep.subr.mxu0 0.0
    %1312 = vmatpush1.msra.mxu0 0.0
    %1313 = vmatprep.subr.mxu0 0.0
    %1314 = vmatpush1.msra.mxu0 0.0
    %1315 = vmatprep.subr.mxu0 0.0
    %1316 = vmatpush1.msra.mxu0 0.0
    %1317 = vmatprep.subr.mxu0 0.0
    %1318 = vmatpush1.msra.mxu0 0.0
    %1319 = vmatprep.subr.mxu0 0.0
    %1320 = vmatpush1.msra.mxu0 0.0
    %1321 = vmatprep.subr.mxu0 0.0
    %1322 = vmatpush1.msra.mxu0 0.0
    %1323 = vmatprep.subr.mxu0 0.0
    %1324 = vmatpush1.msra.mxu0 0.0
    %1325 = vmatprep.subr.mxu0 0.0
    %1326 = vmatpush1.msra.mxu0 0.0
    %1327 = vmatprep.subr.mxu0 0.0
    %1328 = vmatpush1.msra.mxu0 0.0
    %1329 = vmatprep.subr.mxu0 0.0
    %1330 = vmatpush1.msra.mxu0 0.0
    %1331 = vmatprep.subr.mxu0 0.0
    %1332 = vmatpush1.msra.mxu0 0.0
    %1333 = vmatprep.subr.mxu0 0.0
    %1334 = vmatpush1.msra.mxu0 0.0
    %1335 = vmatprep.subr.mxu0 0.0
    %1336 = vmatpush1.msra.mxu0 0.0
    %1337 = vmatprep.subr.mxu0 0.0
    %1338 = vmatpush1.msra.mxu0 0.0
    %1339 = vmatprep.subr.mxu0 0.0
    %1340 = vmatpush1.msra.mxu0 0.0
    %1341 = vmatprep.subr.mxu0 0.0
    %1342 = vmatpush1.msra.mxu0 0.0
    %1343 = vmatprep.subr.mxu0 0.0
    %1344 = vmatpush1.msra.mxu0 0.0
    %1345 = vmatprep.subr.mxu0 0.0
    %1346 = vmatpush1.msra.mxu0 0.0
    %1347 = vmatprep.subr.mxu0 0.0
    %1348 = vmatpush1.msra.mxu0 0.0
    %1349 = vmatprep.mubr.f32.mxu0 0.0
    %1350 = vmatmul.mubr.f32.gmra.mrb[0].mxu0 %v1283
    %v1351 = vpop.f32.mrb[0].mxu0
    %v1352 = vadd.f32 %v1280, %v1351
    %v1353 = vpop.f32.mrb[0].mxu0
    %1354 = vdwg.mxu0
    %v1355 = vmax.f32 %v1352, 0.0
    %s1356 = scalar_lea.vmem [#allocation2], 96
    %v1357 = vld [vmem:[%s1356] sm:$0xff]
    %v1358 = vld [vmem:[%s1356 + $0x8] sm:$0xff]
    %v1359 = vld [vmem:[%s1356 + $0x10] sm:$0xff]
    %v1360 = vld [vmem:[%s1356 + $0x18] sm:$0xff]
    %v1362 = vsel %vm131, %v1355, 0
    %1364 = vmatprep.subr.mxu0 0.0
    %1365 = vmatpush1.msra.mxu0 %v1357
    %1366 = vmatprep.subr.mxu0 0.0
    %1367 = vmatpush1.msra.mxu0 %v1358
    %1368 = vmatprep.subr.mxu0 0.0
    %1369 = vmatpush1.msra.mxu0 %v1359
    %1370 = vmatprep.subr.mxu0 0.0
    %1371 = vmatpush1.msra.mxu0 %v1360
    %1372 = vmatprep.subr.mxu0 0.0
    %1373 = vmatpush1.msra.mxu0 0.0
    %1374 = vmatprep.subr.mxu0 0.0
    %1375 = vmatpush1.msra.mxu0 0.0
    %1376 = vmatprep.subr.mxu0 0.0
    %1377 = vmatpush1.msra.mxu0 0.0
    %1378 = vmatprep.subr.mxu0 0.0
    %1379 = vmatpush1.msra.mxu0 0.0
    %1380 = vmatprep.subr.mxu0 0.0
    %1381 = vmatpush1.msra.mxu0 0.0
    %1382 = vmatprep.subr.mxu0 0.0
    %1383 = vmatpush1.msra.mxu0 0.0
    %1384 = vmatprep.subr.mxu0 0.0
    %1385 = vmatpush1.msra.mxu0 0.0
    %1386 = vmatprep.subr.mxu0 0.0
    %1387 = vmatpush1.msra.mxu0 0.0
    %1388 = vmatprep.subr.mxu0 0.0
    %1389 = vmatpush1.msra.mxu0 0.0
    %1390 = vmatprep.subr.mxu0 0.0
    %1391 = vmatpush1.msra.mxu0 0.0
    %1392 = vmatprep.subr.mxu0 0.0
    %1393 = vmatpush1.msra.mxu0 0.0
    %1394 = vmatprep.subr.mxu0 0.0
    %1395 = vmatpush1.msra.mxu0 0.0
    %1396 = vmatprep.subr.mxu0 0.0
    %1397 = vmatpush1.msra.mxu0 0.0
    %1398 = vmatprep.subr.mxu0 0.0
    %1399 = vmatpush1.msra.mxu0 0.0
    %1400 = vmatprep.subr.mxu0 0.0
    %1401 = vmatpush1.msra.mxu0 0.0
    %1402 = vmatprep.subr.mxu0 0.0
    %1403 = vmatpush1.msra.mxu0 0.0
    %1404 = vmatprep.subr.mxu0 0.0
    %1405 = vmatpush1.msra.mxu0 0.0
    %1406 = vmatprep.subr.mxu0 0.0
    %1407 = vmatpush1.msra.mxu0 0.0
    %1408 = vmatprep.subr.mxu0 0.0
    %1409 = vmatpush1.msra.mxu0 0.0
    %1410 = vmatprep.subr.mxu0 0.0
    %1411 = vmatpush1.msra.mxu0 0.0
    %1412 = vmatprep.subr.mxu0 0.0
    %1413 = vmatpush1.msra.mxu0 0.0
    %1414 = vmatprep.subr.mxu0 0.0
    %1415 = vmatpush1.msra.mxu0 0.0
    %1416 = vmatprep.subr.mxu0 0.0
    %1417 = vmatpush1.msra.mxu0 0.0
    %1418 = vmatprep.subr.mxu0 0.0
    %1419 = vmatpush1.msra.mxu0 0.0
    %1420 = vmatprep.subr.mxu0 0.0
    %1421 = vmatpush1.msra.mxu0 0.0
    %1422 = vmatprep.subr.mxu0 0.0
    %1423 = vmatpush1.msra.mxu0 0.0
    %1424 = vmatprep.subr.mxu0 0.0
    %1425 = vmatpush1.msra.mxu0 0.0
    %1426 = vmatprep.subr.mxu0 0.0
    %1427 = vmatpush1.msra.mxu0 0.0
    %1428 = vmatprep.mubr.f32.mxu0 0.0
    %1429 = vmatmul.mubr.f32.gmra.mrb[0].mxu0 %v1362
    %v1430 = vpop.f32.mrb[0].mxu0
    %v1431 = vadd.f32 %v46, %v1430
    %v1432 = vpop.f32.mrb[0].mxu0
    %1433 = vdwg.mxu0
    %1434 = vst [vmem:[#allocation5] sm:$0x1] %v1431
    // Predicated region
    $region38: #{tpu_custom_call.1} parent=1 // pred_check
      _
    $region39: #{tpu_custom_call.1} parent=1 // pred_check_branch
      %1436 = sbr.rel (0) target = $region41
    $region40: #{tpu_custom_call.1} parent=1 // pred_region
      %s1438 = ssub.s32 16, 16
      %1439 = vsyncadd [#allocation4], %s1438
      %s1441 = sshll.u32 [#allocation5], 4
      %s1442 = int_to_ptr.vmem [resolvable:$true] %s1441
      %1444 = dma.vmem_to_hbm [thread:$0]  %s1442, 16, %s8, [#allocation4]
    $region41: #{tpu_custom_call.1} parent=1 // pred_fallthru
      _
    // Predicated region
    $region42: #{tpu_custom_call.1} parent=1 // pred_check
      _
    $region43: #{tpu_custom_call.1} parent=1 // pred_check_branch
      %1446 = sbr.rel (0) target = $region45
    $region44: #{tpu_custom_call.1} parent=1 // pred_region
      %1447 = dma.done [#allocation4], 16
    $region45: #{tpu_custom_call.1} parent=1 // pred_fallthru
      _
    %1448 = vsyncpa [#allocation3], 1
    %1449 = vsyncpa [#allocation4], 1

</llo_original>
